<compile_context>
chip_gen: v5e
topology: v5e:2x2
jax: 0.10.0
libtpu: 0.0.40
codegen_flags: <defaults>
</compile_context>

<pallas_src>
import functools

import jax
import jax.numpy as jnp
from jax.experimental import pallas as pl
from jax.experimental.pallas import tpu as pltpu

EPS = 1e-5
LANE = 128    # output channels padded to a lane multiple -> lane-dense stores
_WMARG = 8    # left zero-halo margin (one f32 sublane tile) in the conv2 scratch


# ----------------------------- sizing helpers -----------------------------

def _round_up(x, m):
    return ((x + m - 1) // m) * m


def _vmem_bytes():
    try:
        v = getattr(pltpu.get_tpu_info(), "vmem_capacity_bytes", None)
        if v:
            return int(v)
    except Exception:
        pass
    return 64 * 1024 * 1024  # conservative fallback (v7x per-TC VMEM)


def _compiler_params():
    return pltpu.CompilerParams(
        dimension_semantics=("parallel",),
        vmem_limit_bytes=int(_vmem_bytes() * 0.6),
    )


def _pick_nb(N, per_step_img_bytes, fixed_bytes):
    """Images per grid step: biggest that fits the VMEM budget, >=2 grid steps."""
    budget = int(_vmem_bytes() * 0.3)
    avail = max(budget - fixed_bytes, per_step_img_bytes)
    nb = max(1, min(avail // per_step_img_bytes, 8))
    if N > 1:
        nb = min(nb, (N + 1) // 2)   # keep >= 2 steps for megacore / pipelining
    return int(min(nb, N))


# ----------------------------- wrapper-side glue -----------------------------

def _fold_conv_bn_taps(w, bn, cin_pad, cout_pad):
    """PyTorch conv weight [O,I,kh,kw] + BN -> bf16 [kh*kw, cin_pad, cout_pad]
    per-tap matrices (BN scale folded into output columns, zero-padded), plus a
    f32 [1, cout_pad] bias."""
    gamma, beta, mean, var = bn
    O, I, kh, kw = w.shape
    scale = gamma / jnp.sqrt(var + EPS)
    bias = beta - mean * scale
    wt = jnp.transpose(w.astype(jnp.float32), (2, 3, 1, 0)) * scale   # (kh,kw,I,O)
    wt = jnp.pad(wt, ((0, 0), (0, 0), (0, cin_pad - I), (0, cout_pad - O)))
    wt = wt.reshape(kh * kw, cin_pad, cout_pad).astype(jnp.bfloat16)
    b = jnp.pad(bias.astype(jnp.float32), (0, cout_pad - O)).reshape(1, cout_pad)
    return wt, b


def _phase_split(x, stride, Ho, Wo):
    """x: [N,H,W,C] -> bf16 [N, S2*Hph, Wph, C]: the zero-padded-by-1 image,
    split into stride^2 phases so every 3x3 tap (and the 1x1 shortcut) becomes
    a unit-stride window inside the kernel."""
    xp = jnp.pad(x, ((0, 0), (1, 1), (1, 1), (0, 0))).astype(jnp.bfloat16)
    Hph = Ho + 2 // stride
    Wph = Wo + 2 // stride
    phases = []
    for py in range(stride):
        for px in range(stride):
            ph = xp[:, py::stride, px::stride, :]
            dh = max(0, Hph - ph.shape[1])
            dw = max(0, Wph - ph.shape[2])
            if dh or dw:
                ph = jnp.pad(ph, ((0, 0), (0, dh), (0, dw), (0, 0)))
            phases.append(ph[:, :Hph, :Wph, :])
    return jnp.concatenate(phases, axis=1), Hph, Wph


# ----------------------------- the fused kernel -----------------------------

def _basic_block_kernel(stride, Ho, Wo, Hph, nb, emit_pre,
                        xph_ref, w1_ref, b1_ref, w2_ref, b2_ref,
                        wsc_ref, bsc_ref, *outs_and_scratch):
    if emit_pre:
        out_ref, pre_ref, scr = outs_and_scratch
    else:
        out_ref, scr = outs_and_scratch
        pre_ref = None

    Cin = xph_ref.shape[-1]
    Cp = w1_ref.shape[-1]
    M = nb * Ho * Wo

    # conv2 zero halo: the scratch border rows/columns must read as zero.
    scr[...] = jnp.zeros_like(scr)

    # ---- conv1 (3x3, stride, pad 1) + bn1 + relu: 9 shifted-window matmuls ----
    acc1 = jnp.zeros((M, Cp), jnp.float32)
    for dy in range(3):
        for dx in range(3):
            ph = (dy % stride) * stride + (dx % stride)
            oy, ox = dy // stride, dx // stride
            xs = xph_ref[:, ph * Hph + oy:ph * Hph + oy + Ho, ox:ox + Wo, :]
            acc1 = acc1 + jnp.dot(xs.reshape(M, Cin), w1_ref[3 * dy + dx],
                                  preferred_element_type=jnp.float32)
    out1 = jnp.maximum(acc1 + b1_ref[...], 0.0)
    # tile-aligned store into the halo scratch (H offset 1, W offset _WMARG=8)
    scr[:, 1:Ho + 1, _WMARG:_WMARG + Wo, :] = out1.reshape(nb, Ho, Wo, Cp)

    # ---- conv2 (3x3, s=1, pad 1) + bn2: 9 shifted-window matmuls over VMEM ----
    acc2 = jnp.zeros((M, Cp), jnp.float32)
    for dy in range(3):
        for dx in range(3):
            x2 = scr[:, dy:dy + Ho, _WMARG - 1 + dx:_WMARG - 1 + dx + Wo, :]
            acc2 = acc2 + jnp.dot(x2.reshape(M, Cp).astype(jnp.bfloat16),
                                  w2_ref[3 * dy + dx],
                                  preferred_element_type=jnp.float32)

    # ---- shortcut: folded 1x1 conv+BN projection, or [I|0] identity matmul ----
    so = 1 // stride
    sph = (1 % stride) * stride + (1 % stride)
    xs = xph_ref[:, sph * Hph + so:sph * Hph + so + Ho, so:so + Wo, :]
    sc = jnp.dot(xs.reshape(M, Cin), wsc_ref[...],
                 preferred_element_type=jnp.float32)

    pre = acc2 + b2_ref[...] + sc + bsc_ref[...]
    out_ref[...] = jnp.maximum(pre, 0.0).reshape(out_ref.shape)
    if emit_pre:
        pre_ref[...] = pre.reshape(pre_ref.shape)


# ----------------------------- BasicBlock forward -----------------------------

def basic_block_forward_nhwc(x_nhwc, params, stride=1, is_last=False):
    x = x_nhwc.astype(jnp.float32)
    N, H, W, Cin = x.shape
    planes = params["w1"].shape[0]
    Cp = _round_up(planes, LANE)
    Ho = (H + 2 - 3) // stride + 1
    Wo = (W + 2 - 3) // stride + 1
    has_projection = (stride != 1) or (Cin != planes)

    xph, Hph, Wph = _phase_split(x, stride, Ho, Wo)
    S2 = stride * stride

    w1, b1 = _fold_conv_bn_taps(params["w1"], params["bn1"], Cin, Cp)
    w2, b2 = _fold_conv_bn_taps(params["w2"], params["bn2"], Cp, Cp)
    if has_projection:
        wsc, bsc = _fold_conv_bn_taps(params["w_sc"], params["bn_sc"], Cin, Cp)
        wsc = wsc.reshape(Cin, Cp)
    else:
        wsc = jnp.pad(jnp.eye(Cin, dtype=jnp.float32),
                      ((0, 0), (0, Cp - Cin))).astype(jnp.bfloat16)
        bsc = jnp.zeros((1, Cp), jnp.float32)

    n_out = 2 if is_last else 1
    per_img = (S2 * Hph * Wph * Cin * 2                       # phase-split input
               + (Ho + 2) * (_WMARG + Wo + 1) * Cp * 4        # halo scratch
               + (2 + n_out) * Ho * Wo * Cp * 4)              # accums + outputs
    fixed = ((w1.size + w2.size + wsc.size) * 2 * 2
             + (b1.size + b2.size + bsc.size) * 4 * 2)
    nb = _pick_nb(N, 2 * per_img, fixed)

    Np = _round_up(N, nb)
    if Np != N:
        xph = jnp.pad(xph, ((0, Np - N), (0, 0), (0, 0), (0, 0)))

    kernel = functools.partial(_basic_block_kernel, stride, Ho, Wo, Hph, nb, is_last)

    out_shape = [jax.ShapeDtypeStruct((Np, Ho, Wo, Cp), jnp.float32)]
    out_specs = [pl.BlockSpec((nb, Ho, Wo, Cp), lambda i: (i, 0, 0, 0))]
    if is_last:
        out_shape.append(jax.ShapeDtypeStruct((Np, Ho, Wo, Cp), jnp.float32))
        out_specs.append(pl.BlockSpec((nb, Ho, Wo, Cp), lambda i: (i, 0, 0, 0)))

    res = pl.pallas_call(
        kernel,
        out_shape=tuple(out_shape),
        grid=(Np // nb,),
        in_specs=[
            pl.BlockSpec((nb, S2 * Hph, Wph, Cin), lambda i: (i, 0, 0, 0)),
            pl.BlockSpec(w1.shape, lambda i: (0, 0, 0)),
            pl.BlockSpec(b1.shape, lambda i: (0, 0)),
            pl.BlockSpec(w2.shape, lambda i: (0, 0, 0)),
            pl.BlockSpec(b2.shape, lambda i: (0, 0)),
            pl.BlockSpec(wsc.shape, lambda i: (0, 0)),
            pl.BlockSpec(bsc.shape, lambda i: (0, 0)),
        ],
        out_specs=tuple(out_specs),
        scratch_shapes=[pltpu.VMEM((nb, Ho + 2, _WMARG + Wo + 1, Cp), jnp.float32)],
        compiler_params=_compiler_params(),
    )(xph, w1, b1, w2, b2, wsc, bsc)

    if not isinstance(res, (tuple, list)):
        res = (res,)
    out = res[0][:N, :, :, :planes]
    if is_last:
        pre = res[1][:N, :, :, :planes]
        return out, pre
    return out


def basic_block_forward(x_nchw, params, stride=1, is_last=False):
    """PyTorch-layout entry point (NCHW in / NCHW out)."""
    x = jnp.transpose(x_nchw, (0, 2, 3, 1))
    res = basic_block_forward_nhwc(x, params, stride=stride, is_last=is_last)
    if is_last:
        out, pre = res
        return jnp.transpose(out, (0, 3, 1, 2)), jnp.transpose(pre, (0, 3, 1, 2))
    return jnp.transpose(res, (0, 3, 1, 2))


# ----------------------------- pure-JAX reference -----------------------------

def _ref_forward(x_nchw, params, stride):
    x = jnp.transpose(x_nchw, (0, 2, 3, 1)).astype(jnp.float32)

    def conv(inp, w, s, pad):
        return jax.lax.conv_general_dilated(
            inp, jnp.transpose(w, (2, 3, 1, 0)), (s, s), [(pad, pad), (pad, pad)],
            dimension_numbers=("NHWC", "HWIO", "NHWC"))

    def bn(y, p):
        gamma, beta, mean, var = p
        scale = gamma / jnp.sqrt(var + EPS)
        bias = beta - mean * scale
        return y * scale.reshape(1, 1, 1, -1) + bias.reshape(1, 1, 1, -1)

    planes = params["w1"].shape[0]
    out = jax.nn.relu(bn(conv(x, params["w1"], stride, 1), params["bn1"]))
    out = bn(conv(out, params["w2"], 1, 1), params["bn2"])
    if stride != 1 or x.shape[-1] != planes:
        sc = bn(conv(x, params["w_sc"], stride, 0), params["bn_sc"])
    else:
        sc = x
    pre = out + sc
    return jnp.transpose(jax.nn.relu(pre), (0, 3, 1, 2)), jnp.transpose(pre, (0, 3, 1, 2))


# ----------------------------- main -----------------------------

if __name__ == "__main__":
    key = jax.random.PRNGKey(0)

    def conv_init(k, shape):
        fan_in = shape[1] * shape[2] * shape[3]
        return (jax.random.normal(k, shape, jnp.float32) / jnp.sqrt(fan_in)).astype(jnp.float32)

    def bn_init(k, c):
        kg, kb, km, kv = jax.random.split(k, 4)
        return (jax.random.uniform(kg, (c,), jnp.float32, 0.5, 1.5),
                0.1 * jax.random.normal(kb, (c,), jnp.float32),
                0.1 * jax.random.normal(km, (c,), jnp.float32),
                jax.random.uniform(kv, (c,), jnp.float32, 0.5, 1.5))

    # bf16 MXU path vs f32 reference -> loosened tolerance.
    ATOL = RTOL = 3e-2

    # ---- config A: projection shortcut (stride=2, Cin != planes), is_last=True ----
    N, Cin, H, W, planes, stride = 2, 4, 16, 16, 8, 2
    ks = jax.random.split(key, 8)
    params_a = {
        "w1": conv_init(ks[0], (planes, Cin, 3, 3)),
        "bn1": bn_init(ks[1], planes),
        "w2": conv_init(ks[2], (planes, planes, 3, 3)),
        "bn2": bn_init(ks[3], planes),
        "w_sc": conv_init(ks[4], (planes, Cin, 1, 1)),
        "bn_sc": bn_init(ks[5], planes),
    }
    xa = jax.random.normal(ks[6], (N, Cin, H, W), jnp.float32)

    out_a, pre_a = basic_block_forward(xa, params_a, stride=stride, is_last=True)
    out_a, pre_a = jax.block_until_ready((out_a, pre_a))
    ref_out_a, ref_pre_a = _ref_forward(xa, params_a, stride)
    assert out_a.shape == (N, planes, H // stride, W // stride)
    assert jnp.allclose(out_a, ref_out_a, atol=ATOL, rtol=RTOL)
    assert jnp.allclose(pre_a, ref_pre_a, atol=ATOL, rtol=RTOL)

    # ---- config B: identity shortcut (stride=1, Cin == planes), is_last=False ----
    kb_ = jax.random.split(ks[7], 6)
    params_b = {
        "w1": conv_init(kb_[0], (planes, planes, 3, 3)),
        "bn1": bn_init(kb_[1], planes),
        "w2": conv_init(kb_[2], (planes, planes, 3, 3)),
        "bn2": bn_init(kb_[3], planes),
    }
    xb = jax.random.normal(kb_[4], (N, planes, H, W), jnp.float32)

    out_b = basic_block_forward(xb, params_b, stride=1, is_last=False)
    out_b = jax.block_until_ready(out_b)
    ref_out_b, _ = _ref_forward(xb, params_b, 1)
    assert out_b.shape == (N, planes, H, W)
    assert jnp.allclose(out_b, ref_out_b, atol=ATOL, rtol=RTOL)

    print("KERNEL_OK")
</pallas_src>

<mosaic_0001>
module attributes {stable_mosaic.version = 11 : i64} {
  func.func @_basic_block_kernel(%arg0: i32, %arg1: memref<1x36x9x4xbf16, #tpu.memory_space<vmem>>, %arg2: memref<9x4x128xbf16, #tpu.memory_space<vmem>>, %arg3: memref<1x128xf32, #tpu.memory_space<vmem>>, %arg4: memref<9x128x128xbf16, #tpu.memory_space<vmem>>, %arg5: memref<1x128xf32, #tpu.memory_space<vmem>>, %arg6: memref<4x128xbf16, #tpu.memory_space<vmem>>, %arg7: memref<1x128xf32, #tpu.memory_space<vmem>>, %arg8: memref<1x8x8x128xf32, #tpu.memory_space<vmem>>, %arg9: memref<1x8x8x128xf32, #tpu.memory_space<vmem>>, %arg10: memref<1x10x17x128xf32, #tpu.memory_space<vmem>>) attributes {dimension_semantics = [#tpu.dimension_semantics<parallel>], iteration_bounds = array<i64: 2>, scalar_prefetch = 0 : i64, scratch_operands = 1 : i64, tpu.core_type = #tpu.core_type<tc>, window_params = [{transform_indices = @transform_0, window_bounds = array<i64: 1, 36, 9, 4>}, {pipeline_mode = #tpu.pipeline_mode<synchronous>, transform_indices = @transform_1, window_bounds = array<i64: 9, 4, 128>}, {pipeline_mode = #tpu.pipeline_mode<synchronous>, transform_indices = @transform_2, window_bounds = array<i64: 1, 128>}, {pipeline_mode = #tpu.pipeline_mode<synchronous>, transform_indices = @transform_3, window_bounds = array<i64: 9, 128, 128>}, {pipeline_mode = #tpu.pipeline_mode<synchronous>, transform_indices = @transform_4, window_bounds = array<i64: 1, 128>}, {pipeline_mode = #tpu.pipeline_mode<synchronous>, transform_indices = @transform_5, window_bounds = array<i64: 4, 128>}, {pipeline_mode = #tpu.pipeline_mode<synchronous>, transform_indices = @transform_6, window_bounds = array<i64: 1, 128>}, {transform_indices = @transform_7, window_bounds = array<i64: 1, 8, 8, 128>}, {transform_indices = @transform_8, window_bounds = array<i64: 1, 8, 8, 128>}]} {
    %cst = arith.constant 0.000000e+00 : f32
    %0 = vector.broadcast %cst : f32 to vector<1x10x17x128xf32>
    %c0 = arith.constant 0 : index
    %c0_0 = arith.constant 0 : index
    %c0_1 = arith.constant 0 : index
    %c0_2 = arith.constant 0 : index
    %1 = vector.load %arg10[%c0, %c0_0, %c0_1, %c0_2] : memref<1x10x17x128xf32, #tpu.memory_space<vmem>>, vector<1x10x17x128xf32>
    tpu.vector_store %arg10[%c0, %c0_0, %c0_1, %c0_2], %0 {strides = array<i32>} : memref<1x10x17x128xf32, #tpu.memory_space<vmem>>, vector<1x10x17x128xf32>,
    %cst_3 = arith.constant 0.000000e+00 : f32
    %2 = vector.broadcast %cst_3 : f32 to vector<64x128xf32>
    %c0_4 = arith.constant 0 : index
    %c0_5 = arith.constant 0 : index
    %c0_6 = arith.constant 0 : index
    %c0_7 = arith.constant 0 : index
    %3 = vector.load %arg1[%c0_4, %c0_5, %c0_6, %c0_7] : memref<1x36x9x4xbf16, #tpu.memory_space<vmem>>, vector<1x8x8x4xbf16>
    %4 = vector.shape_cast %3 : vector<1x8x8x4xbf16> to vector<64x4xbf16>
    %c0_8 = arith.constant 0 : index
    %c0_9 = arith.constant 0 : index
    %c0_10 = arith.constant 0 : index
    %5 = vector.load %arg2[%c0_8, %c0_9, %c0_10] : memref<9x4x128xbf16, #tpu.memory_space<vmem>>, vector<1x4x128xbf16>
    %6 = vector.shape_cast %5 : vector<1x4x128xbf16> to vector<4x128xbf16>
    %cst_11 = arith.constant dense<0.000000e+00> : vector<64x128xf32>
    %7 = tpu.matmul %4, %6, %cst_11 {dimension_numbers = #tpu.dot_dimension_numbers<[1], [0], [0], [1], [0, 0, 1, 1], [], []>} : vector<64x4xbf16>, vector<4x128xbf16>, vector<64x128xf32> -> vector<64x128xf32>
    %8 = arith.addf %2, %7 : vector<64x128xf32>
    %c0_12 = arith.constant 0 : index
    %c9 = arith.constant 9 : index
    %c0_13 = arith.constant 0 : index
    %c0_14 = arith.constant 0 : index
    %9 = vector.load %arg1[%c0_12, %c9, %c0_13, %c0_14] : memref<1x36x9x4xbf16, #tpu.memory_space<vmem>>, vector<1x8x8x4xbf16>
    %10 = vector.shape_cast %9 : vector<1x8x8x4xbf16> to vector<64x4xbf16>
    %c1 = arith.constant 1 : index
    %c0_15 = arith.constant 0 : index
    %c0_16 = arith.constant 0 : index
    %11 = vector.load %arg2[%c1, %c0_15, %c0_16] : memref<9x4x128xbf16, #tpu.memory_space<vmem>>, vector<1x4x128xbf16>
    %12 = vector.shape_cast %11 : vector<1x4x128xbf16> to vector<4x128xbf16>
    %cst_17 = arith.constant dense<0.000000e+00> : vector<64x128xf32>
    %13 = tpu.matmul %10, %12, %cst_17 {dimension_numbers = #tpu.dot_dimension_numbers<[1], [0], [0], [1], [0, 0, 1, 1], [], []>} : vector<64x4xbf16>, vector<4x128xbf16>, vector<64x128xf32> -> vector<64x128xf32>
    %14 = arith.addf %8, %13 : vector<64x128xf32>
    %c0_18 = arith.constant 0 : index
    %c0_19 = arith.constant 0 : index
    %c1_20 = arith.constant 1 : index
    %c0_21 = arith.constant 0 : index
    %15 = vector.load %arg1[%c0_18, %c0_19, %c1_20, %c0_21] : memref<1x36x9x4xbf16, #tpu.memory_space<vmem>>, vector<1x8x8x4xbf16>
    %16 = vector.shape_cast %15 : vector<1x8x8x4xbf16> to vector<64x4xbf16>
    %c2 = arith.constant 2 : index
    %c0_22 = arith.constant 0 : index
    %c0_23 = arith.constant 0 : index
    %17 = vector.load %arg2[%c2, %c0_22, %c0_23] : memref<9x4x128xbf16, #tpu.memory_space<vmem>>, vector<1x4x128xbf16>
    %18 = vector.shape_cast %17 : vector<1x4x128xbf16> to vector<4x128xbf16>
    %cst_24 = arith.constant dense<0.000000e+00> : vector<64x128xf32>
    %19 = tpu.matmul %16, %18, %cst_24 {dimension_numbers = #tpu.dot_dimension_numbers<[1], [0], [0], [1], [0, 0, 1, 1], [], []>} : vector<64x4xbf16>, vector<4x128xbf16>, vector<64x128xf32> -> vector<64x128xf32>
    %20 = arith.addf %14, %19 : vector<64x128xf32>
    %c0_25 = arith.constant 0 : index
    %c18 = arith.constant 18 : index
    %c0_26 = arith.constant 0 : index
    %c0_27 = arith.constant 0 : index
    %21 = vector.load %arg1[%c0_25, %c18, %c0_26, %c0_27] : memref<1x36x9x4xbf16, #tpu.memory_space<vmem>>, vector<1x8x8x4xbf16>
    %22 = vector.shape_cast %21 : vector<1x8x8x4xbf16> to vector<64x4xbf16>
    %c3 = arith.constant 3 : index
    %c0_28 = arith.constant 0 : index
    %c0_29 = arith.constant 0 : index
    %23 = vector.load %arg2[%c3, %c0_28, %c0_29] : memref<9x4x128xbf16, #tpu.memory_space<vmem>>, vector<1x4x128xbf16>
    %24 = vector.shape_cast %23 : vector<1x4x128xbf16> to vector<4x128xbf16>
    %cst_30 = arith.constant dense<0.000000e+00> : vector<64x128xf32>
    %25 = tpu.matmul %22, %24, %cst_30 {dimension_numbers = #tpu.dot_dimension_numbers<[1], [0], [0], [1], [0, 0, 1, 1], [], []>} : vector<64x4xbf16>, vector<4x128xbf16>, vector<64x128xf32> -> vector<64x128xf32>
    %26 = arith.addf %20, %25 : vector<64x128xf32>
    %c0_31 = arith.constant 0 : index
    %c27 = arith.constant 27 : index
    %c0_32 = arith.constant 0 : index
    %c0_33 = arith.constant 0 : index
    %27 = vector.load %arg1[%c0_31, %c27, %c0_32, %c0_33] : memref<1x36x9x4xbf16, #tpu.memory_space<vmem>>, vector<1x8x8x4xbf16>
    %28 = vector.shape_cast %27 : vector<1x8x8x4xbf16> to vector<64x4xbf16>
    %c4 = arith.constant 4 : index
    %c0_34 = arith.constant 0 : index
    %c0_35 = arith.constant 0 : index
    %29 = vector.load %arg2[%c4, %c0_34, %c0_35] : memref<9x4x128xbf16, #tpu.memory_space<vmem>>, vector<1x4x128xbf16>
    %30 = vector.shape_cast %29 : vector<1x4x128xbf16> to vector<4x128xbf16>
    %cst_36 = arith.constant dense<0.000000e+00> : vector<64x128xf32>
    %31 = tpu.matmul %28, %30, %cst_36 {dimension_numbers = #tpu.dot_dimension_numbers<[1], [0], [0], [1], [0, 0, 1, 1], [], []>} : vector<64x4xbf16>, vector<4x128xbf16>, vector<64x128xf32> -> vector<64x128xf32>
    %32 = arith.addf %26, %31 : vector<64x128xf32>
    %c0_37 = arith.constant 0 : index
    %c18_38 = arith.constant 18 : index
    %c1_39 = arith.constant 1 : index
    %c0_40 = arith.constant 0 : index
    %33 = vector.load %arg1[%c0_37, %c18_38, %c1_39, %c0_40] : memref<1x36x9x4xbf16, #tpu.memory_space<vmem>>, vector<1x8x8x4xbf16>
    %34 = vector.shape_cast %33 : vector<1x8x8x4xbf16> to vector<64x4xbf16>
    %c5 = arith.constant 5 : index
    %c0_41 = arith.constant 0 : index
    %c0_42 = arith.constant 0 : index
    %35 = vector.load %arg2[%c5, %c0_41, %c0_42] : memref<9x4x128xbf16, #tpu.memory_space<vmem>>, vector<1x4x128xbf16>
    %36 = vector.shape_cast %35 : vector<1x4x128xbf16> to vector<4x128xbf16>
    %cst_43 = arith.constant dense<0.000000e+00> : vector<64x128xf32>
    %37 = tpu.matmul %34, %36, %cst_43 {dimension_numbers = #tpu.dot_dimension_numbers<[1], [0], [0], [1], [0, 0, 1, 1], [], []>} : vector<64x4xbf16>, vector<4x128xbf16>, vector<64x128xf32> -> vector<64x128xf32>
    %38 = arith.addf %32, %37 : vector<64x128xf32>
    %c0_44 = arith.constant 0 : index
    %c1_45 = arith.constant 1 : index
    %c0_46 = arith.constant 0 : index
    %c0_47 = arith.constant 0 : index
    %39 = vector.load %arg1[%c0_44, %c1_45, %c0_46, %c0_47] : memref<1x36x9x4xbf16, #tpu.memory_space<vmem>>, vector<1x8x8x4xbf16>
    %40 = vector.shape_cast %39 : vector<1x8x8x4xbf16> to vector<64x4xbf16>
    %c6 = arith.constant 6 : index
    %c0_48 = arith.constant 0 : index
    %c0_49 = arith.constant 0 : index
    %41 = vector.load %arg2[%c6, %c0_48, %c0_49] : memref<9x4x128xbf16, #tpu.memory_space<vmem>>, vector<1x4x128xbf16>
    %42 = vector.shape_cast %41 : vector<1x4x128xbf16> to vector<4x128xbf16>
    %cst_50 = arith.constant dense<0.000000e+00> : vector<64x128xf32>
    %43 = tpu.matmul %40, %42, %cst_50 {dimension_numbers = #tpu.dot_dimension_numbers<[1], [0], [0], [1], [0, 0, 1, 1], [], []>} : vector<64x4xbf16>, vector<4x128xbf16>, vector<64x128xf32> -> vector<64x128xf32>
    %44 = arith.addf %38, %43 : vector<64x128xf32>
    %c0_51 = arith.constant 0 : index
    %c10 = arith.constant 10 : index
    %c0_52 = arith.constant 0 : index
    %c0_53 = arith.constant 0 : index
    %45 = vector.load %arg1[%c0_51, %c10, %c0_52, %c0_53] : memref<1x36x9x4xbf16, #tpu.memory_space<vmem>>, vector<1x8x8x4xbf16>
    %46 = vector.shape_cast %45 : vector<1x8x8x4xbf16> to vector<64x4xbf16>
    %c7 = arith.constant 7 : index
    %c0_54 = arith.constant 0 : index
    %c0_55 = arith.constant 0 : index
    %47 = vector.load %arg2[%c7, %c0_54, %c0_55] : memref<9x4x128xbf16, #tpu.memory_space<vmem>>, vector<1x4x128xbf16>
    %48 = vector.shape_cast %47 : vector<1x4x128xbf16> to vector<4x128xbf16>
    %cst_56 = arith.constant dense<0.000000e+00> : vector<64x128xf32>
    %49 = tpu.matmul %46, %48, %cst_56 {dimension_numbers = #tpu.dot_dimension_numbers<[1], [0], [0], [1], [0, 0, 1, 1], [], []>} : vector<64x4xbf16>, vector<4x128xbf16>, vector<64x128xf32> -> vector<64x128xf32>
    %50 = arith.addf %44, %49 : vector<64x128xf32>
    %c0_57 = arith.constant 0 : index
    %c1_58 = arith.constant 1 : index
    %c1_59 = arith.constant 1 : index
    %c0_60 = arith.constant 0 : index
    %51 = vector.load %arg1[%c0_57, %c1_58, %c1_59, %c0_60] : memref<1x36x9x4xbf16, #tpu.memory_space<vmem>>, vector<1x8x8x4xbf16>
    %52 = vector.shape_cast %51 : vector<1x8x8x4xbf16> to vector<64x4xbf16>
    %c8 = arith.constant 8 : index
    %c0_61 = arith.constant 0 : index
    %c0_62 = arith.constant 0 : index
    %53 = vector.load %arg2[%c8, %c0_61, %c0_62] : memref<9x4x128xbf16, #tpu.memory_space<vmem>>, vector<1x4x128xbf16>
    %54 = vector.shape_cast %53 : vector<1x4x128xbf16> to vector<4x128xbf16>
    %cst_63 = arith.constant dense<0.000000e+00> : vector<64x128xf32>
    %55 = tpu.matmul %52, %54, %cst_63 {dimension_numbers = #tpu.dot_dimension_numbers<[1], [0], [0], [1], [0, 0, 1, 1], [], []>} : vector<64x4xbf16>, vector<4x128xbf16>, vector<64x128xf32> -> vector<64x128xf32>
    %56 = arith.addf %50, %55 : vector<64x128xf32>
    %c0_64 = arith.constant 0 : index
    %c0_65 = arith.constant 0 : index
    %57 = vector.load %arg3[%c0_64, %c0_65] : memref<1x128xf32, #tpu.memory_space<vmem>>, vector<1x128xf32>
    %58 = vector.broadcast %57 : vector<1x128xf32> to vector<64x128xf32>
    %59 = arith.addf %56, %58 : vector<64x128xf32>
    %cst_66 = arith.constant 0.000000e+00 : f32
    %60 = vector.broadcast %cst_66 : f32 to vector<64x128xf32>
    %61 = arith.maximumf %59, %60 : vector<64x128xf32>
    %62 = vector.shape_cast %61 : vector<64x128xf32> to vector<1x8x8x128xf32>
    %c0_67 = arith.constant 0 : index
    %c1_68 = arith.constant 1 : index
    %c8_69 = arith.constant 8 : index
    %c0_70 = arith.constant 0 : index
    %63 = vector.load %arg10[%c0_67, %c1_68, %c8_69, %c0_70] : memref<1x10x17x128xf32, #tpu.memory_space<vmem>>, vector<1x8x8x128xf32>
    tpu.vector_store %arg10[%c0_67, %c1_68, %c8_69, %c0_70], %62 {strides = array<i32>} : memref<1x10x17x128xf32, #tpu.memory_space<vmem>>, vector<1x8x8x128xf32>,
    %cst_71 = arith.constant 0.000000e+00 : f32
    %64 = vector.broadcast %cst_71 : f32 to vector<64x128xf32>
    %c0_72 = arith.constant 0 : index
    %c0_73 = arith.constant 0 : index
    %c7_74 = arith.constant 7 : index
    %c0_75 = arith.constant 0 : index
    %65 = vector.load %arg10[%c0_72, %c0_73, %c7_74, %c0_75] : memref<1x10x17x128xf32, #tpu.memory_space<vmem>>, vector<1x8x8x128xf32>
    %66 = vector.shape_cast %65 : vector<1x8x8x128xf32> to vector<64x128xf32>
    %67 = arith.truncf %66 : vector<64x128xf32> to vector<64x128xbf16>
    %c0_76 = arith.constant 0 : index
    %c0_77 = arith.constant 0 : index
    %c0_78 = arith.constant 0 : index
    %68 = vector.load %arg4[%c0_76, %c0_77, %c0_78] : memref<9x128x128xbf16, #tpu.memory_space<vmem>>, vector<1x128x128xbf16>
    %69 = vector.shape_cast %68 : vector<1x128x128xbf16> to vector<128x128xbf16>
    %cst_79 = arith.constant dense<0.000000e+00> : vector<64x128xf32>
    %70 = tpu.matmul %67, %69, %cst_79 {dimension_numbers = #tpu.dot_dimension_numbers<[1], [0], [0], [1], [0, 0, 1, 1], [], []>} : vector<64x128xbf16>, vector<128x128xbf16>, vector<64x128xf32> -> vector<64x128xf32>
    %71 = arith.addf %64, %70 : vector<64x128xf32>
    %c0_80 = arith.constant 0 : index
    %c0_81 = arith.constant 0 : index
    %c8_82 = arith.constant 8 : index
    %c0_83 = arith.constant 0 : index
    %72 = vector.load %arg10[%c0_80, %c0_81, %c8_82, %c0_83] : memref<1x10x17x128xf32, #tpu.memory_space<vmem>>, vector<1x8x8x128xf32>
    %73 = vector.shape_cast %72 : vector<1x8x8x128xf32> to vector<64x128xf32>
    %74 = arith.truncf %73 : vector<64x128xf32> to vector<64x128xbf16>
    %c1_84 = arith.constant 1 : index
    %c0_85 = arith.constant 0 : index
    %c0_86 = arith.constant 0 : index
    %75 = vector.load %arg4[%c1_84, %c0_85, %c0_86] : memref<9x128x128xbf16, #tpu.memory_space<vmem>>, vector<1x128x128xbf16>
    %76 = vector.shape_cast %75 : vector<1x128x128xbf16> to vector<128x128xbf16>
    %cst_87 = arith.constant dense<0.000000e+00> : vector<64x128xf32>
    %77 = tpu.matmul %74, %76, %cst_87 {dimension_numbers = #tpu.dot_dimension_numbers<[1], [0], [0], [1], [0, 0, 1, 1], [], []>} : vector<64x128xbf16>, vector<128x128xbf16>, vector<64x128xf32> -> vector<64x128xf32>
    %78 = arith.addf %71, %77 : vector<64x128xf32>
    %c0_88 = arith.constant 0 : index
    %c0_89 = arith.constant 0 : index
    %c9_90 = arith.constant 9 : index
    %c0_91 = arith.constant 0 : index
    %79 = vector.load %arg10[%c0_88, %c0_89, %c9_90, %c0_91] : memref<1x10x17x128xf32, #tpu.memory_space<vmem>>, vector<1x8x8x128xf32>
    %80 = vector.shape_cast %79 : vector<1x8x8x128xf32> to vector<64x128xf32>
    %81 = arith.truncf %80 : vector<64x128xf32> to vector<64x128xbf16>
    %c2_92 = arith.constant 2 : index
    %c0_93 = arith.constant 0 : index
    %c0_94 = arith.constant 0 : index
    %82 = vector.load %arg4[%c2_92, %c0_93, %c0_94] : memref<9x128x128xbf16, #tpu.memory_space<vmem>>, vector<1x128x128xbf16>
    %83 = vector.shape_cast %82 : vector<1x128x128xbf16> to vector<128x128xbf16>
    %cst_95 = arith.constant dense<0.000000e+00> : vector<64x128xf32>
    %84 = tpu.matmul %81, %83, %cst_95 {dimension_numbers = #tpu.dot_dimension_numbers<[1], [0], [0], [1], [0, 0, 1, 1], [], []>} : vector<64x128xbf16>, vector<128x128xbf16>, vector<64x128xf32> -> vector<64x128xf32>
    %85 = arith.addf %78, %84 : vector<64x128xf32>
    %c0_96 = arith.constant 0 : index
    %c1_97 = arith.constant 1 : index
    %c7_98 = arith.constant 7 : index
    %c0_99 = arith.constant 0 : index
    %86 = vector.load %arg10[%c0_96, %c1_97, %c7_98, %c0_99] : memref<1x10x17x128xf32, #tpu.memory_space<vmem>>, vector<1x8x8x128xf32>
    %87 = vector.shape_cast %86 : vector<1x8x8x128xf32> to vector<64x128xf32>
    %88 = arith.truncf %87 : vector<64x128xf32> to vector<64x128xbf16>
    %c3_100 = arith.constant 3 : index
    %c0_101 = arith.constant 0 : index
    %c0_102 = arith.constant 0 : index
    %89 = vector.load %arg4[%c3_100, %c0_101, %c0_102] : memref<9x128x128xbf16, #tpu.memory_space<vmem>>, vector<1x128x128xbf16>
    %90 = vector.shape_cast %89 : vector<1x128x128xbf16> to vector<128x128xbf16>
    %cst_103 = arith.constant dense<0.000000e+00> : vector<64x128xf32>
    %91 = tpu.matmul %88, %90, %cst_103 {dimension_numbers = #tpu.dot_dimension_numbers<[1], [0], [0], [1], [0, 0, 1, 1], [], []>} : vector<64x128xbf16>, vector<128x128xbf16>, vector<64x128xf32> -> vector<64x128xf32>
    %92 = arith.addf %85, %91 : vector<64x128xf32>
    %c0_104 = arith.constant 0 : index
    %c1_105 = arith.constant 1 : index
    %c8_106 = arith.constant 8 : index
    %c0_107 = arith.constant 0 : index
    %93 = vector.load %arg10[%c0_104, %c1_105, %c8_106, %c0_107] : memref<1x10x17x128xf32, #tpu.memory_space<vmem>>, vector<1x8x8x128xf32>
    %94 = vector.shape_cast %93 : vector<1x8x8x128xf32> to vector<64x128xf32>
    %95 = arith.truncf %94 : vector<64x128xf32> to vector<64x128xbf16>
    %c4_108 = arith.constant 4 : index
    %c0_109 = arith.constant 0 : index
    %c0_110 = arith.constant 0 : index
    %96 = vector.load %arg4[%c4_108, %c0_109, %c0_110] : memref<9x128x128xbf16, #tpu.memory_space<vmem>>, vector<1x128x128xbf16>
    %97 = vector.shape_cast %96 : vector<1x128x128xbf16> to vector<128x128xbf16>
    %cst_111 = arith.constant dense<0.000000e+00> : vector<64x128xf32>
    %98 = tpu.matmul %95, %97, %cst_111 {dimension_numbers = #tpu.dot_dimension_numbers<[1], [0], [0], [1], [0, 0, 1, 1], [], []>} : vector<64x128xbf16>, vector<128x128xbf16>, vector<64x128xf32> -> vector<64x128xf32>
    %99 = arith.addf %92, %98 : vector<64x128xf32>
    %c0_112 = arith.constant 0 : index
    %c1_113 = arith.constant 1 : index
    %c9_114 = arith.constant 9 : index
    %c0_115 = arith.constant 0 : index
    %100 = vector.load %arg10[%c0_112, %c1_113, %c9_114, %c0_115] : memref<1x10x17x128xf32, #tpu.memory_space<vmem>>, vector<1x8x8x128xf32>
    %101 = vector.shape_cast %100 : vector<1x8x8x128xf32> to vector<64x128xf32>
    %102 = arith.truncf %101 : vector<64x128xf32> to vector<64x128xbf16>
    %c5_116 = arith.constant 5 : index
    %c0_117 = arith.constant 0 : index
    %c0_118 = arith.constant 0 : index
    %103 = vector.load %arg4[%c5_116, %c0_117, %c0_118] : memref<9x128x128xbf16, #tpu.memory_space<vmem>>, vector<1x128x128xbf16>
    %104 = vector.shape_cast %103 : vector<1x128x128xbf16> to vector<128x128xbf16>
    %cst_119 = arith.constant dense<0.000000e+00> : vector<64x128xf32>
    %105 = tpu.matmul %102, %104, %cst_119 {dimension_numbers = #tpu.dot_dimension_numbers<[1], [0], [0], [1], [0, 0, 1, 1], [], []>} : vector<64x128xbf16>, vector<128x128xbf16>, vector<64x128xf32> -> vector<64x128xf32>
    %106 = arith.addf %99, %105 : vector<64x128xf32>
    %c0_120 = arith.constant 0 : index
    %c2_121 = arith.constant 2 : index
    %c7_122 = arith.constant 7 : index
    %c0_123 = arith.constant 0 : index
    %107 = vector.load %arg10[%c0_120, %c2_121, %c7_122, %c0_123] : memref<1x10x17x128xf32, #tpu.memory_space<vmem>>, vector<1x8x8x128xf32>
    %108 = vector.shape_cast %107 : vector<1x8x8x128xf32> to vector<64x128xf32>
    %109 = arith.truncf %108 : vector<64x128xf32> to vector<64x128xbf16>
    %c6_124 = arith.constant 6 : index
    %c0_125 = arith.constant 0 : index
    %c0_126 = arith.constant 0 : index
    %110 = vector.load %arg4[%c6_124, %c0_125, %c0_126] : memref<9x128x128xbf16, #tpu.memory_space<vmem>>, vector<1x128x128xbf16>
    %111 = vector.shape_cast %110 : vector<1x128x128xbf16> to vector<128x128xbf16>
    %cst_127 = arith.constant dense<0.000000e+00> : vector<64x128xf32>
    %112 = tpu.matmul %109, %111, %cst_127 {dimension_numbers = #tpu.dot_dimension_numbers<[1], [0], [0], [1], [0, 0, 1, 1], [], []>} : vector<64x128xbf16>, vector<128x128xbf16>, vector<64x128xf32> -> vector<64x128xf32>
    %113 = arith.addf %106, %112 : vector<64x128xf32>
    %c0_128 = arith.constant 0 : index
    %c2_129 = arith.constant 2 : index
    %c8_130 = arith.constant 8 : index
    %c0_131 = arith.constant 0 : index
    %114 = vector.load %arg10[%c0_128, %c2_129, %c8_130, %c0_131] : memref<1x10x17x128xf32, #tpu.memory_space<vmem>>, vector<1x8x8x128xf32>
    %115 = vector.shape_cast %114 : vector<1x8x8x128xf32> to vector<64x128xf32>
    %116 = arith.truncf %115 : vector<64x128xf32> to vector<64x128xbf16>
    %c7_132 = arith.constant 7 : index
    %c0_133 = arith.constant 0 : index
    %c0_134 = arith.constant 0 : index
    %117 = vector.load %arg4[%c7_132, %c0_133, %c0_134] : memref<9x128x128xbf16, #tpu.memory_space<vmem>>, vector<1x128x128xbf16>
    %118 = vector.shape_cast %117 : vector<1x128x128xbf16> to vector<128x128xbf16>
    %cst_135 = arith.constant dense<0.000000e+00> : vector<64x128xf32>
    %119 = tpu.matmul %116, %118, %cst_135 {dimension_numbers = #tpu.dot_dimension_numbers<[1], [0], [0], [1], [0, 0, 1, 1], [], []>} : vector<64x128xbf16>, vector<128x128xbf16>, vector<64x128xf32> -> vector<64x128xf32>
    %120 = arith.addf %113, %119 : vector<64x128xf32>
    %c0_136 = arith.constant 0 : index
    %c2_137 = arith.constant 2 : index
    %c9_138 = arith.constant 9 : index
    %c0_139 = arith.constant 0 : index
    %121 = vector.load %arg10[%c0_136, %c2_137, %c9_138, %c0_139] : memref<1x10x17x128xf32, #tpu.memory_space<vmem>>, vector<1x8x8x128xf32>
    %122 = vector.shape_cast %121 : vector<1x8x8x128xf32> to vector<64x128xf32>
    %123 = arith.truncf %122 : vector<64x128xf32> to vector<64x128xbf16>
    %c8_140 = arith.constant 8 : index
    %c0_141 = arith.constant 0 : index
    %c0_142 = arith.constant 0 : index
    %124 = vector.load %arg4[%c8_140, %c0_141, %c0_142] : memref<9x128x128xbf16, #tpu.memory_space<vmem>>, vector<1x128x128xbf16>
    %125 = vector.shape_cast %124 : vector<1x128x128xbf16> to vector<128x128xbf16>
    %cst_143 = arith.constant dense<0.000000e+00> : vector<64x128xf32>
    %126 = tpu.matmul %123, %125, %cst_143 {dimension_numbers = #tpu.dot_dimension_numbers<[1], [0], [0], [1], [0, 0, 1, 1], [], []>} : vector<64x128xbf16>, vector<128x128xbf16>, vector<64x128xf32> -> vector<64x128xf32>
    %127 = arith.addf %120, %126 : vector<64x128xf32>
    %c0_144 = arith.constant 0 : index
    %c27_145 = arith.constant 27 : index
    %c0_146 = arith.constant 0 : index
    %c0_147 = arith.constant 0 : index
    %128 = vector.load %arg1[%c0_144, %c27_145, %c0_146, %c0_147] : memref<1x36x9x4xbf16, #tpu.memory_space<vmem>>, vector<1x8x8x4xbf16>
    %129 = vector.shape_cast %128 : vector<1x8x8x4xbf16> to vector<64x4xbf16>
    %c0_148 = arith.constant 0 : index
    %c0_149 = arith.constant 0 : index
    %130 = vector.load %arg6[%c0_148, %c0_149] : memref<4x128xbf16, #tpu.memory_space<vmem>>, vector<4x128xbf16>
    %cst_150 = arith.constant dense<0.000000e+00> : vector<64x128xf32>
    %131 = tpu.matmul %129, %130, %cst_150 {dimension_numbers = #tpu.dot_dimension_numbers<[1], [0], [0], [1], [0, 0, 1, 1], [], []>} : vector<64x4xbf16>, vector<4x128xbf16>, vector<64x128xf32> -> vector<64x128xf32>
    %c0_151 = arith.constant 0 : index
    %c0_152 = arith.constant 0 : index
    %132 = vector.load %arg5[%c0_151, %c0_152] : memref<1x128xf32, #tpu.memory_space<vmem>>, vector<1x128xf32>
    %133 = vector.broadcast %132 : vector<1x128xf32> to vector<64x128xf32>
    %134 = arith.addf %127, %133 : vector<64x128xf32>
    %135 = arith.addf %134, %131 : vector<64x128xf32>
    %c0_153 = arith.constant 0 : index
    %c0_154 = arith.constant 0 : index
    %136 = vector.load %arg7[%c0_153, %c0_154] : memref<1x128xf32, #tpu.memory_space<vmem>>, vector<1x128xf32>
    %137 = vector.broadcast %136 : vector<1x128xf32> to vector<64x128xf32>
    %138 = arith.addf %135, %137 : vector<64x128xf32>
    %cst_155 = arith.constant 0.000000e+00 : f32
    %139 = vector.broadcast %cst_155 : f32 to vector<64x128xf32>
    %140 = arith.maximumf %138, %139 : vector<64x128xf32>
    %141 = vector.shape_cast %140 : vector<64x128xf32> to vector<1x8x8x128xf32>
    %c0_156 = arith.constant 0 : index
    %c0_157 = arith.constant 0 : index
    %c0_158 = arith.constant 0 : index
    %c0_159 = arith.constant 0 : index
    %142 = vector.load %arg8[%c0_156, %c0_157, %c0_158, %c0_159] : memref<1x8x8x128xf32, #tpu.memory_space<vmem>>, vector<1x8x8x128xf32>
    tpu.vector_store %arg8[%c0_156, %c0_157, %c0_158, %c0_159], %141 {strides = array<i32>} : memref<1x8x8x128xf32, #tpu.memory_space<vmem>>, vector<1x8x8x128xf32>,
    %143 = vector.shape_cast %138 : vector<64x128xf32> to vector<1x8x8x128xf32>
    %c0_160 = arith.constant 0 : index
    %c0_161 = arith.constant 0 : index
    %c0_162 = arith.constant 0 : index
    %c0_163 = arith.constant 0 : index
    %144 = vector.load %arg9[%c0_160, %c0_161, %c0_162, %c0_163] : memref<1x8x8x128xf32, #tpu.memory_space<vmem>>, vector<1x8x8x128xf32>
    tpu.vector_store %arg9[%c0_160, %c0_161, %c0_162, %c0_163], %143 {strides = array<i32>} : memref<1x8x8x128xf32, #tpu.memory_space<vmem>>, vector<1x8x8x128xf32>,
    return
  }
  func.func @transform_0(%arg0: i32) -> (i32, i32, i32, i32) {
    %c0_i32 = arith.constant 0 : i32
    %c0_i32_0 = arith.constant 0 : i32
    %c0_i32_1 = arith.constant 0 : i32
    %c0_i32_2 = arith.constant 0 : i32
    return %arg0, %c0_i32, %c0_i32_0, %c0_i32_1 : i32, i32, i32, i32
  }
  func.func @transform_1(%arg0: i32) -> (i32, i32, i32) {
    %c0_i32 = arith.constant 0 : i32
    %c0_i32_0 = arith.constant 0 : i32
    %c0_i32_1 = arith.constant 0 : i32
    %c0_i32_2 = arith.constant 0 : i32
    return %c0_i32, %c0_i32_0, %c0_i32_1 : i32, i32, i32
  }
  func.func @transform_2(%arg0: i32) -> (i32, i32) {
    %c0_i32 = arith.constant 0 : i32
    %c0_i32_0 = arith.constant 0 : i32
    %c0_i32_1 = arith.constant 0 : i32
    return %c0_i32, %c0_i32_0 : i32, i32
  }
  func.func @transform_3(%arg0: i32) -> (i32, i32, i32) {
    %c0_i32 = arith.constant 0 : i32
    %c0_i32_0 = arith.constant 0 : i32
    %c0_i32_1 = arith.constant 0 : i32
    %c0_i32_2 = arith.constant 0 : i32
    return %c0_i32, %c0_i32_0, %c0_i32_1 : i32, i32, i32
  }
  func.func @transform_4(%arg0: i32) -> (i32, i32) {
    %c0_i32 = arith.constant 0 : i32
    %c0_i32_0 = arith.constant 0 : i32
    %c0_i32_1 = arith.constant 0 : i32
    return %c0_i32, %c0_i32_0 : i32, i32
  }
  func.func @transform_5(%arg0: i32) -> (i32, i32) {
    %c0_i32 = arith.constant 0 : i32
    %c0_i32_0 = arith.constant 0 : i32
    %c0_i32_1 = arith.constant 0 : i32
    return %c0_i32, %c0_i32_0 : i32, i32
  }
  func.func @transform_6(%arg0: i32) -> (i32, i32) {
    %c0_i32 = arith.constant 0 : i32
    %c0_i32_0 = arith.constant 0 : i32
    %c0_i32_1 = arith.constant 0 : i32
    return %c0_i32, %c0_i32_0 : i32, i32
  }
  func.func @transform_7(%arg0: i32) -> (i32, i32, i32, i32) {
    %c0_i32 = arith.constant 0 : i32
    %c0_i32_0 = arith.constant 0 : i32
    %c0_i32_1 = arith.constant 0 : i32
    %c0_i32_2 = arith.constant 0 : i32
    return %arg0, %c0_i32, %c0_i32_0, %c0_i32_1 : i32, i32, i32, i32
  }
  func.func @transform_8(%arg0: i32) -> (i32, i32, i32, i32) {
    %c0_i32 = arith.constant 0 : i32
    %c0_i32_0 = arith.constant 0 : i32
    %c0_i32_1 = arith.constant 0 : i32
    %c0_i32_2 = arith.constant 0 : i32
    return %arg0, %c0_i32, %c0_i32_0, %c0_i32_1 : i32, i32, i32, i32
  }
}

</mosaic_0001>

<llo_original>
// kernel: tpu_custom_call.1
$region0: #{tpu_custom_call.1}
  #allocation0 [shape = 'u32[]', space=smem, size = 0x4, offset = 0x4, fixed_abs, tag = 'smem constant byte address 0x4 - core index']
  #allocation1 [shape = 'u32[72,128]{1,0:T(1,128)}', space=vmem, size = 0x9000, scoped, tag = 'internal scratch']
  #allocation2 [shape = 'f32[1,10,17,128]{3,2,1,0:T(8,128)}', space=vmem, size = 0x1e000, scoped, tag = 'scratch operand']
  %s0 = inlined_call_operand.vmem [shape: bf16[2,36,9,4], index: 0, kind: input, shape index: {}]
  %s1 = inlined_call_operand.vmem [shape: bf16[9,4,128], index: 1, kind: input, shape index: {}]
  %s2 = inlined_call_operand.vmem [shape: f32[1,128], index: 2, kind: input, shape index: {}]
  %s3 = inlined_call_operand.vmem [shape: bf16[9,128,128], index: 3, kind: input, shape index: {}]
  %s4 = inlined_call_operand.vmem [shape: f32[1,128], index: 4, kind: input, shape index: {}]
  %s5 = inlined_call_operand.vmem [shape: bf16[4,128], index: 5, kind: input, shape index: {}]
  %s6 = inlined_call_operand.vmem [shape: f32[1,128], index: 6, kind: input, shape index: {}]
  %s7 = inlined_call_operand.hbm [shape: f32[2,8,8,128], index: 7, kind: output, shape index: {0}]
  %s8 = inlined_call_operand.hbm [shape: f32[2,8,8,128], index: 8, kind: output, shape index: {1}]
  %9 = xla_tuple %s7, %s8
  %s10 = sld [smem:[#allocation0]]
  $region69: #{tpu_custom_call.1} parent=0
    _
  %s12 = ssub.s32 1, %s10
  %s13 = scalar_select 0, %s12, %s10
  $region1: #{tpu_custom_call.1} parent=0
    #allocation3 [shape = 'u8[65536]{0}', space=vmem, size = 0x10000, scoped, tag = 'output window, operand 0']
    #allocation4 [shape = 's32[2]{0}', space=sflag, size = 0x8, scoped, tag = 'scoped memory for tpu_custom_call.1']
    #allocation5 [shape = 'u8[65536]{0}', space=vmem, size = 0x10000, scoped, tag = 'output window, operand 1']
    #allocation6 [shape = 's32[2]{0}', space=sflag, size = 0x8, scoped, tag = 'scoped memory for tpu_custom_call.1']
    %14 = vsyncpa [#allocation4], 0
    %s15 = scalar_lea.sflag [#allocation4], 1
    %16 = vsyncpa %s15, 0
    %17 = vsyncpa [#allocation6], 0
    %s18 = scalar_lea.sflag [#allocation6], 1
    %19 = vsyncpa %s18, 0
    loop: start=0, step=1, limit=4
    $region2: #{tpu_custom_call.1} parent=1 // loop_pre_header
      _
    $region3: #{tpu_custom_call.1} parent=1 // loop_header
      %s21 = sphi 0, %s25
      %p22 = scmp.ge.s32.totalorder %s21, 4
      %s31 = sphi 0, %s33
      %s34 = sphi 0, %s31
      %s35 = sphi 0, %s34
      %s51 = sphi 0, %s35
      %s55 = sphi 0, %s55
      %s57 = sphi 0, %s55
      %s58 = sphi 0, %s57
      %s72 = sphi 0, %s58
      %s76 = sphi 0, %s76
      %s78 = sphi 0, %s76
      %s79 = sphi 0, %s78
      %s93 = sphi 0, %s79
      %s97 = sphi 0, %s97
      %s99 = sphi 0, %s97
      %s100 = sphi 0, %s99
      %s114 = sphi 0, %s100
      %s118 = sphi 0, %s118
      %s120 = sphi 0, %s118
      %s121 = sphi 0, %s120
      %s135 = sphi 0, %s121
      %s139 = sphi 0, %s139
      %s141 = sphi 0, %s139
      %s142 = sphi 0, %s141
      %s156 = sphi 0, %s142
      %s160 = sphi 0, %s160
      %s162 = sphi 0, %s160
      %s163 = sphi 0, %s162
      %s177 = sphi 0, %s163
      %s183 = sphi 0, %s185
      %s186 = sphi 0, %s183
      %s187 = sphi 0, %s186
      %s203 = sphi 0, %s187
      %s209 = sphi 0, %s211
      %s212 = sphi 0, %s209
      %s213 = sphi 0, %s212
      %s229 = sphi 0, %s213
    $region4: #{tpu_custom_call.1} parent=1 // loop_header_branch
      %24 = sbr.rel (%p22) target = $region8
    $region5: #{tpu_custom_call.1} parent=1 // loop_body
      %s26 = ssub.s32 %s21, 1
      %s27 = ssub.s32 %s21, 2
      %s28 = sadd.s32 %s21, 1
      %s29 = ssub.s32 %s21, %s28
      %p30 = scmp.eq.s32.totalorder %s29, 0
      %s32 = sadd.s32 %s31, 1
      %s33 = scalar_select %p30, %s31, %s32
      %p36 = pneg %p30
      %p37 = scmp.eq.s32.totalorder %s21, 1
      %p38 = por %p36, %p37
      %p39 = scmp.ne.s32.totalorder %s31, %s34
      %p40 = scmp.eq.s32.totalorder %s21, 0
      %p41 = por %p39, %p40
      %p42 = scmp.ne.s32.totalorder %s31, %s34
      %p43 = scmp.eq.s32.totalorder %s26, 1
      %p44 = por %p42, %p43
      %p45 = scmp.ne.s32.totalorder %s34, %s35
      %p46 = scmp.eq.s32.totalorder %s26, 0
      %p47 = por %p45, %p46
      %p48 = scmp.ne.s32.totalorder %s34, %s35
      %p49 = scmp.eq.s32.totalorder %s27, 1
      %p50 = por %p48, %p49
      %p52 = scmp.ne.s32.totalorder %s35, %s51
      %p53 = scmp.eq.s32.totalorder %s27, 0
      %p54 = por %p52, %p53
      %s56 = sadd.s32 %s55, 1
      %p59 = scmp.eq.s32.totalorder %s21, 1
      %p60 = scmp.ne.s32.totalorder %s55, %s57
      %p61 = scmp.eq.s32.totalorder %s21, 0
      %p62 = por %p60, %p61
      %p63 = scmp.ne.s32.totalorder %s55, %s57
      %p64 = scmp.eq.s32.totalorder %s26, 1
      %p65 = por %p63, %p64
      %p66 = scmp.ne.s32.totalorder %s57, %s58
      %p67 = scmp.eq.s32.totalorder %s26, 0
      %p68 = por %p66, %p67
      %p69 = scmp.ne.s32.totalorder %s57, %s58
      %p70 = scmp.eq.s32.totalorder %s27, 1
      %p71 = por %p69, %p70
      %p73 = scmp.ne.s32.totalorder %s58, %s72
      %p74 = scmp.eq.s32.totalorder %s27, 0
      %p75 = por %p73, %p74
      %s77 = sadd.s32 %s76, 1
      %p80 = scmp.eq.s32.totalorder %s21, 1
      %p81 = scmp.ne.s32.totalorder %s76, %s78
      %p82 = scmp.eq.s32.totalorder %s21, 0
      %p83 = por %p81, %p82
      %p84 = scmp.ne.s32.totalorder %s76, %s78
      %p85 = scmp.eq.s32.totalorder %s26, 1
      %p86 = por %p84, %p85
      %p87 = scmp.ne.s32.totalorder %s78, %s79
      %p88 = scmp.eq.s32.totalorder %s26, 0
      %p89 = por %p87, %p88
      %p90 = scmp.ne.s32.totalorder %s78, %s79
      %p91 = scmp.eq.s32.totalorder %s27, 1
      %p92 = por %p90, %p91
      %p94 = scmp.ne.s32.totalorder %s79, %s93
      %p95 = scmp.eq.s32.totalorder %s27, 0
      %p96 = por %p94, %p95
      %s98 = sadd.s32 %s97, 1
      %p101 = scmp.eq.s32.totalorder %s21, 1
      %p102 = scmp.ne.s32.totalorder %s97, %s99
      %p103 = scmp.eq.s32.totalorder %s21, 0
      %p104 = por %p102, %p103
      %p105 = scmp.ne.s32.totalorder %s97, %s99
      %p106 = scmp.eq.s32.totalorder %s26, 1
      %p107 = por %p105, %p106
      %p108 = scmp.ne.s32.totalorder %s99, %s100
      %p109 = scmp.eq.s32.totalorder %s26, 0
      %p110 = por %p108, %p109
      %p111 = scmp.ne.s32.totalorder %s99, %s100
      %p112 = scmp.eq.s32.totalorder %s27, 1
      %p113 = por %p111, %p112
      %p115 = scmp.ne.s32.totalorder %s100, %s114
      %p116 = scmp.eq.s32.totalorder %s27, 0
      %p117 = por %p115, %p116
      %s119 = sadd.s32 %s118, 1
      %p122 = scmp.eq.s32.totalorder %s21, 1
      %p123 = scmp.ne.s32.totalorder %s118, %s120
      %p124 = scmp.eq.s32.totalorder %s21, 0
      %p125 = por %p123, %p124
      %p126 = scmp.ne.s32.totalorder %s118, %s120
      %p127 = scmp.eq.s32.totalorder %s26, 1
      %p128 = por %p126, %p127
      %p129 = scmp.ne.s32.totalorder %s120, %s121
      %p130 = scmp.eq.s32.totalorder %s26, 0
      %p131 = por %p129, %p130
      %p132 = scmp.ne.s32.totalorder %s120, %s121
      %p133 = scmp.eq.s32.totalorder %s27, 1
      %p134 = por %p132, %p133
      %p136 = scmp.ne.s32.totalorder %s121, %s135
      %p137 = scmp.eq.s32.totalorder %s27, 0
      %p138 = por %p136, %p137
      %s140 = sadd.s32 %s139, 1
      %p143 = scmp.eq.s32.totalorder %s21, 1
      %p144 = scmp.ne.s32.totalorder %s139, %s141
      %p145 = scmp.eq.s32.totalorder %s21, 0
      %p146 = por %p144, %p145
      %p147 = scmp.ne.s32.totalorder %s139, %s141
      %p148 = scmp.eq.s32.totalorder %s26, 1
      %p149 = por %p147, %p148
      %p150 = scmp.ne.s32.totalorder %s141, %s142
      %p151 = scmp.eq.s32.totalorder %s26, 0
      %p152 = por %p150, %p151
      %p153 = scmp.ne.s32.totalorder %s141, %s142
      %p154 = scmp.eq.s32.totalorder %s27, 1
      %p155 = por %p153, %p154
      %p157 = scmp.ne.s32.totalorder %s142, %s156
      %p158 = scmp.eq.s32.totalorder %s27, 0
      %p159 = por %p157, %p158
      %s161 = sadd.s32 %s160, 1
      %p164 = scmp.eq.s32.totalorder %s21, 1
      %p165 = scmp.ne.s32.totalorder %s160, %s162
      %p166 = scmp.eq.s32.totalorder %s21, 0
      %p167 = por %p165, %p166
      %p168 = scmp.ne.s32.totalorder %s160, %s162
      %p169 = scmp.eq.s32.totalorder %s26, 1
      %p170 = por %p168, %p169
      %p171 = scmp.ne.s32.totalorder %s162, %s163
      %p172 = scmp.eq.s32.totalorder %s26, 0
      %p173 = por %p171, %p172
      %p174 = scmp.ne.s32.totalorder %s162, %s163
      %p175 = scmp.eq.s32.totalorder %s27, 1
      %p176 = por %p174, %p175
      %p178 = scmp.ne.s32.totalorder %s163, %s177
      %p179 = scmp.eq.s32.totalorder %s27, 0
      %p180 = por %p178, %p179
      %s181 = ssub.s32 %s21, %s28
      %p182 = scmp.eq.s32.totalorder %s181, 0
      %s184 = sadd.s32 %s183, 1
      %s185 = scalar_select %p182, %s183, %s184
      %p188 = pneg %p182
      %p189 = scmp.eq.s32.totalorder %s21, 1
      %p190 = por %p188, %p189
      %p191 = scmp.ne.s32.totalorder %s183, %s186
      %p192 = scmp.eq.s32.totalorder %s21, 0
      %p193 = por %p191, %p192
      %p194 = scmp.ne.s32.totalorder %s183, %s186
      %p195 = scmp.eq.s32.totalorder %s26, 1
      %p196 = por %p194, %p195
      %p197 = scmp.ne.s32.totalorder %s186, %s187
      %p198 = scmp.eq.s32.totalorder %s26, 0
      %p199 = por %p197, %p198
      %p200 = scmp.ne.s32.totalorder %s186, %s187
      %p201 = scmp.eq.s32.totalorder %s27, 1
      %p202 = por %p200, %p201
      %p204 = scmp.ne.s32.totalorder %s187, %s203
      %p205 = scmp.eq.s32.totalorder %s27, 0
      %p206 = por %p204, %p205
      %s207 = ssub.s32 %s21, %s28
      %p208 = scmp.eq.s32.totalorder %s207, 0
      %s210 = sadd.s32 %s209, 1
      %s211 = scalar_select %p208, %s209, %s210
      %p214 = pneg %p208
      %p215 = scmp.eq.s32.totalorder %s21, 1
      %p216 = por %p214, %p215
      %p217 = scmp.ne.s32.totalorder %s209, %s212
      %p218 = scmp.eq.s32.totalorder %s21, 0
      %p219 = por %p217, %p218
      %p220 = scmp.ne.s32.totalorder %s209, %s212
      %p221 = scmp.eq.s32.totalorder %s26, 1
      %p222 = por %p220, %p221
      %p223 = scmp.ne.s32.totalorder %s212, %s213
      %p224 = scmp.eq.s32.totalorder %s26, 0
      %p225 = por %p223, %p224
      %p226 = scmp.ne.s32.totalorder %s212, %s213
      %p227 = scmp.eq.s32.totalorder %s27, 1
      %p228 = por %p226, %p227
      %p230 = scmp.ne.s32.totalorder %s213, %s229
      %p231 = scmp.eq.s32.totalorder %s27, 0
      %p232 = por %p230, %p231
      %p233 = scmp.le.s32.totalorder 1, %s21
      %p234 = scmp.lt.s32.totalorder %s21, 3
      %p235 = pnand %p233, %p234
      %p236 = pneg %p235
      // Predicated region
      $region9: #{tpu_custom_call.1} parent=5 // pred_check
        _
      $region10: #{tpu_custom_call.1} parent=5 // pred_check_branch
        %238 = sbr.rel (%p235) target = $region12
      $region11: #{tpu_custom_call.1} parent=5 // pred_region
        %s239 = ssub.s32 %s21, 1
        // Predicated region
        $region13: #{tpu_custom_call.1} parent=11 // pred_check
          %p240 = pneg %p68
        $region14: #{tpu_custom_call.1} parent=11 // pred_check_branch
          %242 = sbr.rel (%p240) target = $region16
        $region15: #{tpu_custom_call.1} parent=11 // pred_region
          _
        $region16: #{tpu_custom_call.1} parent=11 // pred_fallthru
          _
        // Predicated region
        $region17: #{tpu_custom_call.1} parent=11 // pred_check
          %p243 = pneg %p89
        $region18: #{tpu_custom_call.1} parent=11 // pred_check_branch
          %245 = sbr.rel (%p243) target = $region20
        $region19: #{tpu_custom_call.1} parent=11 // pred_region
          _
        $region20: #{tpu_custom_call.1} parent=11 // pred_fallthru
          _
        // Predicated region
        $region21: #{tpu_custom_call.1} parent=11 // pred_check
          %p246 = pneg %p110
        $region22: #{tpu_custom_call.1} parent=11 // pred_check_branch
          %248 = sbr.rel (%p246) target = $region24
        $region23: #{tpu_custom_call.1} parent=11 // pred_region
          _
        $region24: #{tpu_custom_call.1} parent=11 // pred_fallthru
          _
        // Predicated region
        $region25: #{tpu_custom_call.1} parent=11 // pred_check
          %p249 = pneg %p131
        $region26: #{tpu_custom_call.1} parent=11 // pred_check_branch
          %251 = sbr.rel (%p249) target = $region28
        $region27: #{tpu_custom_call.1} parent=11 // pred_region
          _
        $region28: #{tpu_custom_call.1} parent=11 // pred_fallthru
          _
        // Predicated region
        $region29: #{tpu_custom_call.1} parent=11 // pred_check
          %p252 = pneg %p152
        $region30: #{tpu_custom_call.1} parent=11 // pred_check_branch
          %254 = sbr.rel (%p252) target = $region32
        $region31: #{tpu_custom_call.1} parent=11 // pred_region
          _
        $region32: #{tpu_custom_call.1} parent=11 // pred_fallthru
          _
        // Predicated region
        $region33: #{tpu_custom_call.1} parent=11 // pred_check
          %p255 = pneg %p173
        $region34: #{tpu_custom_call.1} parent=11 // pred_check_branch
          %257 = sbr.rel (%p255) target = $region36
        $region35: #{tpu_custom_call.1} parent=11 // pred_region
          _
        $region36: #{tpu_custom_call.1} parent=11 // pred_fallthru
          _
      $region12: #{tpu_custom_call.1} parent=5 // pred_fallthru
        _
      %p258 = scmp.lt.s32.totalorder %s21, 2
      // Predicated region
      $region37: #{tpu_custom_call.1} parent=5 // pred_check
        %p259 = pneg %p258
      $region38: #{tpu_custom_call.1} parent=5 // pred_check_branch
        %261 = sbr.rel (%p259) target = $region40
      $region39: #{tpu_custom_call.1} parent=5 // pred_region
        // Predicated region
        $region41: #{tpu_custom_call.1} parent=39 // pred_check
          %p262 = pneg %p41
        $region42: #{tpu_custom_call.1} parent=39 // pred_check_branch
          %264 = sbr.rel (%p262) target = $region44
        $region43: #{tpu_custom_call.1} parent=39 // pred_region
          %p265 = scmp.lt.s32.totalorder %s21, 1
          %s266 = scalar_select %p265, %s21, 1
          %s267 = smul.addr %s266, 72
          %s268 = smul.addr %s267, 4
          %s269 = scalar_lea.vmem %s0, %s268
        $region44: #{tpu_custom_call.1} parent=39 // pred_fallthru
          _
      $region40: #{tpu_custom_call.1} parent=5 // pred_fallthru
        _
      %p270 = scmp.le.s32.totalorder 1, %s21
      %p271 = scmp.lt.s32.totalorder %s21, 3
      %p272 = pnand %p270, %p271
      %p273 = pneg %p272
      // Predicated region
      $region45: #{tpu_custom_call.1} parent=5 // pred_check
        _
      $region46: #{tpu_custom_call.1} parent=5 // pred_check_branch
        %275 = sbr.rel (%p272) target = $region48
      $region47: #{tpu_custom_call.1} parent=5 // pred_region
        %s276 = ssub.s32 %s21, 1
        %p277 = scmp.lt.s32.totalorder %s26, 1
        %s278 = scalar_select %p277, %s26, 1
        %s279 = smul.addr %s278, 72
        %s280 = smul.addr %s279, 4
        %s281 = scalar_lea.vmem %s0, %s280
        %p282 = pneg %p47
        %p283 = pneg %p44
        %p284 = pneg %p68
        %p285 = pneg %p65
        %p286 = pneg %p89
        %p287 = pneg %p86
        %p288 = pneg %p110
        %p289 = pneg %p107
        %p290 = pneg %p131
        %p291 = pneg %p128
        %p292 = pneg %p152
        %p293 = pneg %p149
        %p294 = pneg %p173
        %p295 = pneg %p170
        %p296 = pneg %p199
        %p297 = pneg %p196
        %s298 = sand.u32 %s186, 1
        %s299 = scalar_lea.sflag [#allocation4], %s298
        %s300 = sand.u32 %s186, 1
        %s301 = smul.addr %s300, 64
        %s302 = scalar_lea.vmem [#allocation3], %s301
        %p303 = pneg %p225
        %p304 = pneg %p222
        %s305 = sand.u32 %s212, 1
        %s306 = scalar_lea.sflag [#allocation6], %s305
        %s307 = sand.u32 %s212, 1
        %s308 = smul.addr %s307, 64
        %s309 = scalar_lea.vmem [#allocation5], %s308
        %p310 = scmp.lt.s32.totalorder %s26, 1
        %s311 = scalar_select %p310, %s26, 1
        %s312 = smul.addr %s311, 72
        %s313 = smul.addr %s312, 4
        %s314 = scalar_lea.vmem %s0, %s313
        %316 = vst [vmem:[#allocation2] sm:$0xff] 0.0
        %317 = vst [vmem:[#allocation2 + $0x8] sm:$0xff] 0.0
        %318 = vst [vmem:[#allocation2 + $0x10] sm:$0x1] 0.0
        %319 = vst [vmem:[#allocation2 + $0x18] sm:$0xff] 0.0
        %320 = vst [vmem:[#allocation2 + $0x20] sm:$0xff] 0.0
        %321 = vst [vmem:[#allocation2 + $0x28] sm:$0x1] 0.0
        %322 = vst [vmem:[#allocation2 + $0x30] sm:$0xff] 0.0
        %323 = vst [vmem:[#allocation2 + $0x38] sm:$0xff] 0.0
        %324 = vst [vmem:[#allocation2 + $0x40] sm:$0x1] 0.0
        %325 = vst [vmem:[#allocation2 + $0x48] sm:$0xff] 0.0
        %326 = vst [vmem:[#allocation2 + $0x50] sm:$0xff] 0.0
        %327 = vst [vmem:[#allocation2 + $0x58] sm:$0x1] 0.0
        %328 = vst [vmem:[#allocation2 + $0x60] sm:$0xff] 0.0
        %329 = vst [vmem:[#allocation2 + $0x68] sm:$0xff] 0.0
        %330 = vst [vmem:[#allocation2 + $0x70] sm:$0x1] 0.0
        %331 = vst [vmem:[#allocation2 + $0x78] sm:$0xff] 0.0
        %332 = vst [vmem:[#allocation2 + $0x80] sm:$0xff] 0.0
        %333 = vst [vmem:[#allocation2 + $0x88] sm:$0x1] 0.0
        %334 = vst [vmem:[#allocation2 + $0x90] sm:$0xff] 0.0
        %335 = vst [vmem:[#allocation2 + $0x98] sm:$0xff] 0.0
        %336 = vst [vmem:[#allocation2 + $0xa0] sm:$0x1] 0.0
        %337 = vst [vmem:[#allocation2 + $0xa8] sm:$0xff] 0.0
        %338 = vst [vmem:[#allocation2 + $0xb0] sm:$0xff] 0.0
        %339 = vst [vmem:[#allocation2 + $0xb8] sm:$0x1] 0.0
        %340 = vst [vmem:[#allocation2 + $0xc0] sm:$0xff] 0.0
        %341 = vst [vmem:[#allocation2 + $0xc8] sm:$0xff] 0.0
        %342 = vst [vmem:[#allocation2 + $0xd0] sm:$0x1] 0.0
        %343 = vst [vmem:[#allocation2 + $0xd8] sm:$0xff] 0.0
        %344 = vst [vmem:[#allocation2 + $0xe0] sm:$0xff] 0.0
        %345 = vst [vmem:[#allocation2 + $0xe8] sm:$0x1] 0.0
        %v346 = vld [vmem:[%s314] sm:$0xf]
        %v347 = vld [vmem:[%s314 + $0x8] sm:$0xf]
        %v348 = vld [vmem:[%s314 + $0x10] sm:$0xf]
        %v349 = vld [vmem:[%s314 + $0x18] sm:$0xf]
        %v350 = vld [vmem:[%s314 + $0x20] sm:$0xf]
        %v351 = vld [vmem:[%s314 + $0x28] sm:$0xf]
        %v352 = vld [vmem:[%s314 + $0x30] sm:$0xf]
        %v353 = vld [vmem:[%s314 + $0x38] sm:$0xf]
        %v354 = vld [vmem:[%s1] sm:$0x3]
        %s355 = scalar_lea.vmem %s314, 72
        %v356 = vld [vmem:[%s355] sm:$0xf]
        %v357 = vld [vmem:[%s355 + $0x8] sm:$0xf]
        %v358 = vld [vmem:[%s355 + $0x10] sm:$0xf]
        %v359 = vld [vmem:[%s355 + $0x18] sm:$0xf]
        %v360 = vld [vmem:[%s355 + $0x20] sm:$0xf]
        %v361 = vld [vmem:[%s355 + $0x28] sm:$0xf]
        %v362 = vld [vmem:[%s355 + $0x30] sm:$0xf]
        %v363 = vld [vmem:[%s355 + $0x38] sm:$0xf]
        %s364 = scalar_lea.vmem %s1, 2
        %v365 = vld [vmem:[%s364] sm:$0x3]
        %v374 = vunpack.c.l.b16 %v356
        %v375 = vunpack.c.l.b16 %v357
        %v376 = vunpack.c.l.b16 %v358
        %v377 = vunpack.c.l.b16 %v359
        %v378 = vunpack.c.l.b16 %v360
        %v379 = vunpack.c.l.b16 %v361
        %v380 = vunpack.c.l.b16 %v362
        %v381 = vunpack.c.l.b16 %v363
        %v382 = vpack.c.b16 %v375, %v374
        %v383 = vpack.c.b16 %v377, %v376
        %v384 = vpack.c.b16 %v379, %v378
        %v385 = vpack.c.b16 %v381, %v380
        %vm386 = vcmask 31744
        %v388 = vsel %vm386, %v382, 0
        %v391 = vsel %vm386, %v383, 0
        %v394 = vsel %vm386, %v384, 0
        %v397 = vsel %vm386, %v385, 0
        %vm399 = vcmask 1041408
        %v401 = vsel %vm399, %v365, 0
        %403 = vmatpush.bf16.msra.mxu0 0
        %404 = vmatpush.bf16.msra.mxu0 0
        %405 = vmatpush.bf16.msra.mxu0 0
        %406 = vmatpush.bf16.msra.mxu0 0
        %407 = vmatpush.bf16.msra.mxu0 0
        %408 = vmatpush.bf16.msra.mxu0 0
        %409 = vmatpush.bf16.msra.mxu0 0
        %410 = vmatpush.bf16.msra.mxu0 %v401
        %411 = vmatmul.bf16.gmra.mxu0 %v388
        %v412 = vpop.f32.mrf.mxu0
        %v413 = vadd.f32 0.0, %v412
        %v414 = vpop.f32.mrf.mxu0
        %v415 = vadd.f32 0.0, %v414
        %416 = vmatmul.bf16.gmra.mxu0 %v391
        %v417 = vpop.f32.mrf.mxu0
        %v418 = vadd.f32 0.0, %v417
        %v419 = vpop.f32.mrf.mxu0
        %v420 = vadd.f32 0.0, %v419
        %421 = vmatmul.bf16.gmra.mxu0 %v394
        %v422 = vpop.f32.mrf.mxu0
        %v423 = vadd.f32 0.0, %v422
        %v424 = vpop.f32.mrf.mxu0
        %v425 = vadd.f32 0.0, %v424
        %426 = vmatmul.bf16.gmra.mxu0 %v397
        %v427 = vpop.f32.mrf.mxu0
        %v428 = vadd.f32 0.0, %v427
        %v429 = vpop.f32.mrf.mxu0
        %v430 = vadd.f32 0.0, %v429
        %431 = vdwg.mxu0
        %v440 = vunpack.c.l.b16 %v346
        %v441 = vunpack.c.l.b16 %v347
        %v442 = vunpack.c.l.b16 %v348
        %v443 = vunpack.c.l.b16 %v349
        %v444 = vunpack.c.l.b16 %v350
        %v445 = vunpack.c.l.b16 %v351
        %v446 = vunpack.c.l.b16 %v352
        %v447 = vunpack.c.l.b16 %v353
        %v448 = vpack.c.b16 %v441, %v440
        %v449 = vpack.c.b16 %v443, %v442
        %v450 = vpack.c.b16 %v445, %v444
        %v451 = vpack.c.b16 %v447, %v446
        %v453 = vsel %vm386, %v448, 0
        %v456 = vsel %vm386, %v449, 0
        %v459 = vsel %vm386, %v450, 0
        %v462 = vsel %vm386, %v451, 0
        %v465 = vsel %vm399, %v354, 0
        %467 = vmatpush.bf16.msra.mxu0 0
        %468 = vmatpush.bf16.msra.mxu0 0
        %469 = vmatpush.bf16.msra.mxu0 0
        %470 = vmatpush.bf16.msra.mxu0 0
        %471 = vmatpush.bf16.msra.mxu0 0
        %472 = vmatpush.bf16.msra.mxu0 0
        %473 = vmatpush.bf16.msra.mxu0 0
        %474 = vmatpush.bf16.msra.mxu0 %v465
        %475 = vmatmul.bf16.gmra.mxu0 %v453
        %v476 = vpop.f32.mrf.mxu0
        %v477 = vadd.f32 %v413, %v476
        %v478 = vpop.f32.mrf.mxu0
        %v479 = vadd.f32 %v415, %v478
        %480 = vmatmul.bf16.gmra.mxu0 %v456
        %v481 = vpop.f32.mrf.mxu0
        %v482 = vadd.f32 %v418, %v481
        %v483 = vpop.f32.mrf.mxu0
        %v484 = vadd.f32 %v420, %v483
        %485 = vmatmul.bf16.gmra.mxu0 %v459
        %v486 = vpop.f32.mrf.mxu0
        %v487 = vadd.f32 %v423, %v486
        %v488 = vpop.f32.mrf.mxu0
        %v489 = vadd.f32 %v425, %v488
        %490 = vmatmul.bf16.gmra.mxu0 %v462
        %v491 = vpop.f32.mrf.mxu0
        %v492 = vadd.f32 %v428, %v491
        %v493 = vpop.f32.mrf.mxu0
        %v494 = vadd.f32 %v430, %v493
        %495 = vdwg.mxu0
        %v496 = vld [vmem:[%s314] sm:$0xf]
        %v497 = vld [vmem:[%s314 + $0x4] sm:$0x1]
        %v498 = vld [vmem:[%s314 + $0x8] sm:$0xf]
        %v499 = vld [vmem:[%s314 + $0xc] sm:$0x1]
        %v500 = vld [vmem:[%s314 + $0x10] sm:$0xf]
        %v501 = vld [vmem:[%s314 + $0x14] sm:$0x1]
        %v502 = vld [vmem:[%s314 + $0x18] sm:$0xf]
        %v503 = vld [vmem:[%s314 + $0x1c] sm:$0x1]
        %v504 = vld [vmem:[%s314 + $0x20] sm:$0xf]
        %v505 = vld [vmem:[%s314 + $0x24] sm:$0x1]
        %v506 = vld [vmem:[%s314 + $0x28] sm:$0xf]
        %v507 = vld [vmem:[%s314 + $0x2c] sm:$0x1]
        %v508 = vld [vmem:[%s314 + $0x30] sm:$0xf]
        %v509 = vld [vmem:[%s314 + $0x34] sm:$0x1]
        %v510 = vld [vmem:[%s314 + $0x38] sm:$0xf]
        %v511 = vld [vmem:[%s314 + $0x3c] sm:$0x1]
        %vm512 = vsmask.f32 3328
        %vm513 = vsmask.f32 7440
        %vm514 = vmor %vm512, %vm513
        %v516 = vshrl.u32 %v496, 16
        %v518 = vrot.slane %v516, 4
        %v519 = vshll.u32 %v496, 16
        %v521 = vrot.slane %v519, 5
        %v522 = vor.u32 %v518, %v521
        %v523 = vrot.slane %v522, 4
        %v525 = vshll.u32 %v497, 16
        %v527 = vrot.slane %v525, 5
        %v528 = vsel %vm514, %v523, %v527
        %v530 = vshrl.u32 %v498, 16
        %v532 = vrot.slane %v530, 4
        %v533 = vshll.u32 %v498, 16
        %v535 = vrot.slane %v533, 5
        %v536 = vor.u32 %v532, %v535
        %v537 = vrot.slane %v536, 4
        %v539 = vshll.u32 %v499, 16
        %v541 = vrot.slane %v539, 5
        %v542 = vsel %vm514, %v537, %v541
        %v544 = vshrl.u32 %v500, 16
        %v546 = vrot.slane %v544, 4
        %v547 = vshll.u32 %v500, 16
        %v549 = vrot.slane %v547, 5
        %v550 = vor.u32 %v546, %v549
        %v551 = vrot.slane %v550, 4
        %v553 = vshll.u32 %v501, 16
        %v555 = vrot.slane %v553, 5
        %v556 = vsel %vm514, %v551, %v555
        %v558 = vshrl.u32 %v502, 16
        %v560 = vrot.slane %v558, 4
        %v561 = vshll.u32 %v502, 16
        %v563 = vrot.slane %v561, 5
        %v564 = vor.u32 %v560, %v563
        %v565 = vrot.slane %v564, 4
        %v567 = vshll.u32 %v503, 16
        %v569 = vrot.slane %v567, 5
        %v570 = vsel %vm514, %v565, %v569
        %v572 = vshrl.u32 %v504, 16
        %v574 = vrot.slane %v572, 4
        %v575 = vshll.u32 %v504, 16
        %v577 = vrot.slane %v575, 5
        %v578 = vor.u32 %v574, %v577
        %v579 = vrot.slane %v578, 4
        %v581 = vshll.u32 %v505, 16
        %v583 = vrot.slane %v581, 5
        %v584 = vsel %vm514, %v579, %v583
        %v586 = vshrl.u32 %v506, 16
        %v588 = vrot.slane %v586, 4
        %v589 = vshll.u32 %v506, 16
        %v591 = vrot.slane %v589, 5
        %v592 = vor.u32 %v588, %v591
        %v593 = vrot.slane %v592, 4
        %v595 = vshll.u32 %v507, 16
        %v597 = vrot.slane %v595, 5
        %v598 = vsel %vm514, %v593, %v597
        %v600 = vshrl.u32 %v508, 16
        %v602 = vrot.slane %v600, 4
        %v603 = vshll.u32 %v508, 16
        %v605 = vrot.slane %v603, 5
        %v606 = vor.u32 %v602, %v605
        %v607 = vrot.slane %v606, 4
        %v609 = vshll.u32 %v509, 16
        %v611 = vrot.slane %v609, 5
        %v612 = vsel %vm514, %v607, %v611
        %v614 = vshrl.u32 %v510, 16
        %v616 = vrot.slane %v614, 4
        %v617 = vshll.u32 %v510, 16
        %v619 = vrot.slane %v617, 5
        %v620 = vor.u32 %v616, %v619
        %v621 = vrot.slane %v620, 4
        %v623 = vshll.u32 %v511, 16
        %v625 = vrot.slane %v623, 5
        %v626 = vsel %vm514, %v621, %v625
        %s627 = scalar_lea.vmem %s1, 4
        %v628 = vld [vmem:[%s627] sm:$0x3]
        %v629 = vunpack.c.l.b16 %v528
        %v630 = vunpack.c.l.b16 %v542
        %v631 = vunpack.c.l.b16 %v556
        %v632 = vunpack.c.l.b16 %v570
        %v633 = vunpack.c.l.b16 %v584
        %v634 = vunpack.c.l.b16 %v598
        %v635 = vunpack.c.l.b16 %v612
        %v636 = vunpack.c.l.b16 %v626
        %v637 = vpack.c.b16 %v630, %v629
        %v638 = vpack.c.b16 %v632, %v631
        %v639 = vpack.c.b16 %v634, %v633
        %v640 = vpack.c.b16 %v636, %v635
        %v642 = vsel %vm386, %v637, 0
        %v645 = vsel %vm386, %v638, 0
        %v648 = vsel %vm386, %v639, 0
        %v651 = vsel %vm386, %v640, 0
        %v654 = vsel %vm399, %v628, 0
        %656 = vmatpush.bf16.msra.mxu0 0
        %657 = vmatpush.bf16.msra.mxu0 0
        %658 = vmatpush.bf16.msra.mxu0 0
        %659 = vmatpush.bf16.msra.mxu0 0
        %660 = vmatpush.bf16.msra.mxu0 0
        %661 = vmatpush.bf16.msra.mxu0 0
        %662 = vmatpush.bf16.msra.mxu0 0
        %663 = vmatpush.bf16.msra.mxu0 %v654
        %664 = vmatmul.bf16.gmra.mxu0 %v642
        %v665 = vpop.f32.mrf.mxu0
        %v666 = vadd.f32 0.0, %v665
        %v667 = vpop.f32.mrf.mxu0
        %v668 = vadd.f32 0.0, %v667
        %669 = vmatmul.bf16.gmra.mxu0 %v645
        %v670 = vpop.f32.mrf.mxu0
        %v671 = vadd.f32 0.0, %v670
        %v672 = vpop.f32.mrf.mxu0
        %v673 = vadd.f32 0.0, %v672
        %674 = vmatmul.bf16.gmra.mxu0 %v648
        %v675 = vpop.f32.mrf.mxu0
        %v676 = vadd.f32 0.0, %v675
        %v677 = vpop.f32.mrf.mxu0
        %v678 = vadd.f32 0.0, %v677
        %679 = vmatmul.bf16.gmra.mxu0 %v651
        %v680 = vpop.f32.mrf.mxu0
        %v681 = vadd.f32 0.0, %v680
        %v682 = vpop.f32.mrf.mxu0
        %v683 = vadd.f32 0.0, %v682
        %684 = vdwg.mxu0
        %v685 = vadd.f32 %v477, %v666
        %v686 = vadd.f32 %v479, %v668
        %v687 = vadd.f32 %v482, %v671
        %v688 = vadd.f32 %v484, %v673
        %v689 = vadd.f32 %v487, %v676
        %v690 = vadd.f32 %v489, %v678
        %v691 = vadd.f32 %v492, %v681
        %v692 = vadd.f32 %v494, %v683
        %s693 = scalar_lea.vmem %s314, 144
        %v694 = vld [vmem:[%s693] sm:$0xf]
        %v695 = vld [vmem:[%s693 + $0x8] sm:$0xf]
        %v696 = vld [vmem:[%s693 + $0x10] sm:$0xf]
        %v697 = vld [vmem:[%s693 + $0x18] sm:$0xf]
        %v698 = vld [vmem:[%s693 + $0x20] sm:$0xf]
        %v699 = vld [vmem:[%s693 + $0x28] sm:$0xf]
        %v700 = vld [vmem:[%s693 + $0x30] sm:$0xf]
        %v701 = vld [vmem:[%s693 + $0x38] sm:$0xf]
        %s702 = scalar_lea.vmem %s1, 6
        %v703 = vld [vmem:[%s702] sm:$0x3]
        %v712 = vunpack.c.l.b16 %v694
        %v713 = vunpack.c.l.b16 %v695
        %v714 = vunpack.c.l.b16 %v696
        %v715 = vunpack.c.l.b16 %v697
        %v716 = vunpack.c.l.b16 %v698
        %v717 = vunpack.c.l.b16 %v699
        %v718 = vunpack.c.l.b16 %v700
        %v719 = vunpack.c.l.b16 %v701
        %v720 = vpack.c.b16 %v713, %v712
        %v721 = vpack.c.b16 %v715, %v714
        %v722 = vpack.c.b16 %v717, %v716
        %v723 = vpack.c.b16 %v719, %v718
        %v725 = vsel %vm386, %v720, 0
        %v728 = vsel %vm386, %v721, 0
        %v731 = vsel %vm386, %v722, 0
        %v734 = vsel %vm386, %v723, 0
        %v737 = vsel %vm399, %v703, 0
        %739 = vmatpush.bf16.msra.mxu0 0
        %740 = vmatpush.bf16.msra.mxu0 0
        %741 = vmatpush.bf16.msra.mxu0 0
        %742 = vmatpush.bf16.msra.mxu0 0
        %743 = vmatpush.bf16.msra.mxu0 0
        %744 = vmatpush.bf16.msra.mxu0 0
        %745 = vmatpush.bf16.msra.mxu0 0
        %746 = vmatpush.bf16.msra.mxu0 %v737
        %747 = vmatmul.bf16.gmra.mxu0 %v725
        %v748 = vpop.f32.mrf.mxu0
        %v749 = vadd.f32 0.0, %v748
        %v750 = vpop.f32.mrf.mxu0
        %v751 = vadd.f32 0.0, %v750
        %752 = vmatmul.bf16.gmra.mxu0 %v728
        %v753 = vpop.f32.mrf.mxu0
        %v754 = vadd.f32 0.0, %v753
        %v755 = vpop.f32.mrf.mxu0
        %v756 = vadd.f32 0.0, %v755
        %757 = vmatmul.bf16.gmra.mxu0 %v731
        %v758 = vpop.f32.mrf.mxu0
        %v759 = vadd.f32 0.0, %v758
        %v760 = vpop.f32.mrf.mxu0
        %v761 = vadd.f32 0.0, %v760
        %762 = vmatmul.bf16.gmra.mxu0 %v734
        %v763 = vpop.f32.mrf.mxu0
        %v764 = vadd.f32 0.0, %v763
        %v765 = vpop.f32.mrf.mxu0
        %v766 = vadd.f32 0.0, %v765
        %767 = vdwg.mxu0
        %v768 = vadd.f32 %v685, %v749
        %v769 = vadd.f32 %v686, %v751
        %v770 = vadd.f32 %v687, %v754
        %v771 = vadd.f32 %v688, %v756
        %v772 = vadd.f32 %v689, %v759
        %v773 = vadd.f32 %v690, %v761
        %v774 = vadd.f32 %v691, %v764
        %v775 = vadd.f32 %v692, %v766
        %s776 = scalar_lea.vmem %s314, 216
        %v777 = vld [vmem:[%s776] sm:$0xf]
        %v778 = vld [vmem:[%s776 + $0x8] sm:$0xf]
        %v779 = vld [vmem:[%s776 + $0x10] sm:$0xf]
        %v780 = vld [vmem:[%s776 + $0x18] sm:$0xf]
        %v781 = vld [vmem:[%s776 + $0x20] sm:$0xf]
        %v782 = vld [vmem:[%s776 + $0x28] sm:$0xf]
        %v783 = vld [vmem:[%s776 + $0x30] sm:$0xf]
        %v784 = vld [vmem:[%s776 + $0x38] sm:$0xf]
        %s785 = scalar_lea.vmem %s1, 8
        %v786 = vld [vmem:[%s785] sm:$0x3]
        %v795 = vunpack.c.l.b16 %v777
        %v796 = vunpack.c.l.b16 %v778
        %v797 = vunpack.c.l.b16 %v779
        %v798 = vunpack.c.l.b16 %v780
        %v799 = vunpack.c.l.b16 %v781
        %v800 = vunpack.c.l.b16 %v782
        %v801 = vunpack.c.l.b16 %v783
        %v802 = vunpack.c.l.b16 %v784
        %v803 = vpack.c.b16 %v796, %v795
        %v804 = vpack.c.b16 %v798, %v797
        %v805 = vpack.c.b16 %v800, %v799
        %v806 = vpack.c.b16 %v802, %v801
        %v808 = vsel %vm386, %v803, 0
        %v811 = vsel %vm386, %v804, 0
        %v814 = vsel %vm386, %v805, 0
        %v817 = vsel %vm386, %v806, 0
        %v820 = vsel %vm399, %v786, 0
        %822 = vmatpush.bf16.msra.mxu0 0
        %823 = vmatpush.bf16.msra.mxu0 0
        %824 = vmatpush.bf16.msra.mxu0 0
        %825 = vmatpush.bf16.msra.mxu0 0
        %826 = vmatpush.bf16.msra.mxu0 0
        %827 = vmatpush.bf16.msra.mxu0 0
        %828 = vmatpush.bf16.msra.mxu0 0
        %829 = vmatpush.bf16.msra.mxu0 %v820
        %830 = vmatmul.bf16.gmra.mxu0 %v808
        %v831 = vpop.f32.mrf.mxu0
        %v832 = vadd.f32 0.0, %v831
        %v833 = vpop.f32.mrf.mxu0
        %v834 = vadd.f32 0.0, %v833
        %835 = vmatmul.bf16.gmra.mxu0 %v811
        %v836 = vpop.f32.mrf.mxu0
        %v837 = vadd.f32 0.0, %v836
        %v838 = vpop.f32.mrf.mxu0
        %v839 = vadd.f32 0.0, %v838
        %840 = vmatmul.bf16.gmra.mxu0 %v814
        %v841 = vpop.f32.mrf.mxu0
        %v842 = vadd.f32 0.0, %v841
        %v843 = vpop.f32.mrf.mxu0
        %v844 = vadd.f32 0.0, %v843
        %845 = vmatmul.bf16.gmra.mxu0 %v817
        %v846 = vpop.f32.mrf.mxu0
        %v847 = vadd.f32 0.0, %v846
        %v848 = vpop.f32.mrf.mxu0
        %v849 = vadd.f32 0.0, %v848
        %850 = vdwg.mxu0
        %v851 = vadd.f32 %v768, %v832
        %v852 = vadd.f32 %v769, %v834
        %v853 = vadd.f32 %v770, %v837
        %v854 = vadd.f32 %v771, %v839
        %v855 = vadd.f32 %v772, %v842
        %v856 = vadd.f32 %v773, %v844
        %v857 = vadd.f32 %v774, %v847
        %v858 = vadd.f32 %v775, %v849
        %v859 = vld [vmem:[%s693] sm:$0xf]
        %v860 = vld [vmem:[%s693 + $0x4] sm:$0x1]
        %v861 = vld [vmem:[%s693 + $0x8] sm:$0xf]
        %v862 = vld [vmem:[%s693 + $0xc] sm:$0x1]
        %v863 = vld [vmem:[%s693 + $0x10] sm:$0xf]
        %v864 = vld [vmem:[%s693 + $0x14] sm:$0x1]
        %v865 = vld [vmem:[%s693 + $0x18] sm:$0xf]
        %v866 = vld [vmem:[%s693 + $0x1c] sm:$0x1]
        %v867 = vld [vmem:[%s693 + $0x20] sm:$0xf]
        %v868 = vld [vmem:[%s693 + $0x24] sm:$0x1]
        %v869 = vld [vmem:[%s693 + $0x28] sm:$0xf]
        %v870 = vld [vmem:[%s693 + $0x2c] sm:$0x1]
        %v871 = vld [vmem:[%s693 + $0x30] sm:$0xf]
        %v872 = vld [vmem:[%s693 + $0x34] sm:$0x1]
        %v873 = vld [vmem:[%s693 + $0x38] sm:$0xf]
        %v874 = vld [vmem:[%s693 + $0x3c] sm:$0x1]
        %v876 = vshrl.u32 %v859, 16
        %v878 = vrot.slane %v876, 4
        %v879 = vshll.u32 %v859, 16
        %v881 = vrot.slane %v879, 5
        %v882 = vor.u32 %v878, %v881
        %v883 = vrot.slane %v882, 4
        %v885 = vshll.u32 %v860, 16
        %v887 = vrot.slane %v885, 5
        %v888 = vsel %vm514, %v883, %v887
        %v890 = vshrl.u32 %v861, 16
        %v892 = vrot.slane %v890, 4
        %v893 = vshll.u32 %v861, 16
        %v895 = vrot.slane %v893, 5
        %v896 = vor.u32 %v892, %v895
        %v897 = vrot.slane %v896, 4
        %v899 = vshll.u32 %v862, 16
        %v901 = vrot.slane %v899, 5
        %v902 = vsel %vm514, %v897, %v901
        %v904 = vshrl.u32 %v863, 16
        %v906 = vrot.slane %v904, 4
        %v907 = vshll.u32 %v863, 16
        %v909 = vrot.slane %v907, 5
        %v910 = vor.u32 %v906, %v909
        %v911 = vrot.slane %v910, 4
        %v913 = vshll.u32 %v864, 16
        %v915 = vrot.slane %v913, 5
        %v916 = vsel %vm514, %v911, %v915
        %v918 = vshrl.u32 %v865, 16
        %v920 = vrot.slane %v918, 4
        %v921 = vshll.u32 %v865, 16
        %v923 = vrot.slane %v921, 5
        %v924 = vor.u32 %v920, %v923
        %v925 = vrot.slane %v924, 4
        %v927 = vshll.u32 %v866, 16
        %v929 = vrot.slane %v927, 5
        %v930 = vsel %vm514, %v925, %v929
        %v932 = vshrl.u32 %v867, 16
        %v934 = vrot.slane %v932, 4
        %v935 = vshll.u32 %v867, 16
        %v937 = vrot.slane %v935, 5
        %v938 = vor.u32 %v934, %v937
        %v939 = vrot.slane %v938, 4
        %v941 = vshll.u32 %v868, 16
        %v943 = vrot.slane %v941, 5
        %v944 = vsel %vm514, %v939, %v943
        %v946 = vshrl.u32 %v869, 16
        %v948 = vrot.slane %v946, 4
        %v949 = vshll.u32 %v869, 16
        %v951 = vrot.slane %v949, 5
        %v952 = vor.u32 %v948, %v951
        %v953 = vrot.slane %v952, 4
        %v955 = vshll.u32 %v870, 16
        %v957 = vrot.slane %v955, 5
        %v958 = vsel %vm514, %v953, %v957
        %v960 = vshrl.u32 %v871, 16
        %v962 = vrot.slane %v960, 4
        %v963 = vshll.u32 %v871, 16
        %v965 = vrot.slane %v963, 5
        %v966 = vor.u32 %v962, %v965
        %v967 = vrot.slane %v966, 4
        %v969 = vshll.u32 %v872, 16
        %v971 = vrot.slane %v969, 5
        %v972 = vsel %vm514, %v967, %v971
        %v974 = vshrl.u32 %v873, 16
        %v976 = vrot.slane %v974, 4
        %v977 = vshll.u32 %v873, 16
        %v979 = vrot.slane %v977, 5
        %v980 = vor.u32 %v976, %v979
        %v981 = vrot.slane %v980, 4
        %v983 = vshll.u32 %v874, 16
        %v985 = vrot.slane %v983, 5
        %v986 = vsel %vm514, %v981, %v985
        %s987 = scalar_lea.vmem %s1, 10
        %v988 = vld [vmem:[%s987] sm:$0x3]
        %v989 = vunpack.c.l.b16 %v888
        %v990 = vunpack.c.l.b16 %v902
        %v991 = vunpack.c.l.b16 %v916
        %v992 = vunpack.c.l.b16 %v930
        %v993 = vunpack.c.l.b16 %v944
        %v994 = vunpack.c.l.b16 %v958
        %v995 = vunpack.c.l.b16 %v972
        %v996 = vunpack.c.l.b16 %v986
        %v997 = vpack.c.b16 %v990, %v989
        %v998 = vpack.c.b16 %v992, %v991
        %v999 = vpack.c.b16 %v994, %v993
        %v1000 = vpack.c.b16 %v996, %v995
        %v1002 = vsel %vm386, %v997, 0
        %v1005 = vsel %vm386, %v998, 0
        %v1008 = vsel %vm386, %v999, 0
        %v1011 = vsel %vm386, %v1000, 0
        %v1014 = vsel %vm399, %v988, 0
        %1016 = vmatpush.bf16.msra.mxu0 0
        %1017 = vmatpush.bf16.msra.mxu0 0
        %1018 = vmatpush.bf16.msra.mxu0 0
        %1019 = vmatpush.bf16.msra.mxu0 0
        %1020 = vmatpush.bf16.msra.mxu0 0
        %1021 = vmatpush.bf16.msra.mxu0 0
        %1022 = vmatpush.bf16.msra.mxu0 0
        %1023 = vmatpush.bf16.msra.mxu0 %v1014
        %1024 = vmatmul.bf16.gmra.mxu0 %v1002
        %v1025 = vpop.f32.mrf.mxu0
        %v1026 = vadd.f32 0.0, %v1025
        %v1027 = vpop.f32.mrf.mxu0
        %v1028 = vadd.f32 0.0, %v1027
        %1029 = vmatmul.bf16.gmra.mxu0 %v1005
        %v1030 = vpop.f32.mrf.mxu0
        %v1031 = vadd.f32 0.0, %v1030
        %v1032 = vpop.f32.mrf.mxu0
        %v1033 = vadd.f32 0.0, %v1032
        %1034 = vmatmul.bf16.gmra.mxu0 %v1008
        %v1035 = vpop.f32.mrf.mxu0
        %v1036 = vadd.f32 0.0, %v1035
        %v1037 = vpop.f32.mrf.mxu0
        %v1038 = vadd.f32 0.0, %v1037
        %1039 = vmatmul.bf16.gmra.mxu0 %v1011
        %v1040 = vpop.f32.mrf.mxu0
        %v1041 = vadd.f32 0.0, %v1040
        %v1042 = vpop.f32.mrf.mxu0
        %v1043 = vadd.f32 0.0, %v1042
        %1044 = vdwg.mxu0
        %v1045 = vadd.f32 %v851, %v1026
        %v1046 = vadd.f32 %v852, %v1028
        %v1047 = vadd.f32 %v853, %v1031
        %v1048 = vadd.f32 %v854, %v1033
        %v1049 = vadd.f32 %v855, %v1036
        %v1050 = vadd.f32 %v856, %v1038
        %v1051 = vadd.f32 %v857, %v1041
        %v1052 = vadd.f32 %v858, %v1043
        %s1053 = scalar_lea.vmem %s314, 8
        %v1054 = vld [vmem:[%s1053] sm:$0xf]
        %v1055 = vld [vmem:[%s1053 + $0x8] sm:$0xf]
        %v1056 = vld [vmem:[%s1053 + $0x10] sm:$0xf]
        %v1057 = vld [vmem:[%s1053 + $0x18] sm:$0xf]
        %v1058 = vld [vmem:[%s1053 + $0x20] sm:$0xf]
        %v1059 = vld [vmem:[%s1053 + $0x28] sm:$0xf]
        %v1060 = vld [vmem:[%s1053 + $0x30] sm:$0xf]
        %v1061 = vld [vmem:[%s1053 + $0x38] sm:$0xf]
        %s1062 = scalar_lea.vmem %s1, 12
        %v1063 = vld [vmem:[%s1062] sm:$0x3]
        %v1072 = vunpack.c.l.b16 %v1054
        %v1073 = vunpack.c.l.b16 %v1055
        %v1074 = vunpack.c.l.b16 %v1056
        %v1075 = vunpack.c.l.b16 %v1057
        %v1076 = vunpack.c.l.b16 %v1058
        %v1077 = vunpack.c.l.b16 %v1059
        %v1078 = vunpack.c.l.b16 %v1060
        %v1079 = vunpack.c.l.b16 %v1061
        %v1080 = vpack.c.b16 %v1073, %v1072
        %v1081 = vpack.c.b16 %v1075, %v1074
        %v1082 = vpack.c.b16 %v1077, %v1076
        %v1083 = vpack.c.b16 %v1079, %v1078
        %v1085 = vsel %vm386, %v1080, 0
        %v1088 = vsel %vm386, %v1081, 0
        %v1091 = vsel %vm386, %v1082, 0
        %v1094 = vsel %vm386, %v1083, 0
        %v1097 = vsel %vm399, %v1063, 0
        %1099 = vmatpush.bf16.msra.mxu0 0
        %1100 = vmatpush.bf16.msra.mxu0 0
        %1101 = vmatpush.bf16.msra.mxu0 0
        %1102 = vmatpush.bf16.msra.mxu0 0
        %1103 = vmatpush.bf16.msra.mxu0 0
        %1104 = vmatpush.bf16.msra.mxu0 0
        %1105 = vmatpush.bf16.msra.mxu0 0
        %1106 = vmatpush.bf16.msra.mxu0 %v1097
        %1107 = vmatmul.bf16.gmra.mxu0 %v1085
        %v1108 = vpop.f32.mrf.mxu0
        %v1109 = vadd.f32 0.0, %v1108
        %v1110 = vpop.f32.mrf.mxu0
        %v1111 = vadd.f32 0.0, %v1110
        %1112 = vmatmul.bf16.gmra.mxu0 %v1088
        %v1113 = vpop.f32.mrf.mxu0
        %v1114 = vadd.f32 0.0, %v1113
        %v1115 = vpop.f32.mrf.mxu0
        %v1116 = vadd.f32 0.0, %v1115
        %1117 = vmatmul.bf16.gmra.mxu0 %v1091
        %v1118 = vpop.f32.mrf.mxu0
        %v1119 = vadd.f32 0.0, %v1118
        %v1120 = vpop.f32.mrf.mxu0
        %v1121 = vadd.f32 0.0, %v1120
        %1122 = vmatmul.bf16.gmra.mxu0 %v1094
        %v1123 = vpop.f32.mrf.mxu0
        %v1124 = vadd.f32 0.0, %v1123
        %v1125 = vpop.f32.mrf.mxu0
        %v1126 = vadd.f32 0.0, %v1125
        %1127 = vdwg.mxu0
        %v1128 = vadd.f32 %v1045, %v1109
        %v1129 = vadd.f32 %v1046, %v1111
        %v1130 = vadd.f32 %v1047, %v1114
        %v1131 = vadd.f32 %v1048, %v1116
        %v1132 = vadd.f32 %v1049, %v1119
        %v1133 = vadd.f32 %v1050, %v1121
        %v1134 = vadd.f32 %v1051, %v1124
        %v1135 = vadd.f32 %v1052, %v1126
        %s1136 = scalar_lea.vmem %s314, 80
        %v1137 = vld [vmem:[%s1136] sm:$0xf]
        %v1138 = vld [vmem:[%s1136 + $0x8] sm:$0xf]
        %v1139 = vld [vmem:[%s1136 + $0x10] sm:$0xf]
        %v1140 = vld [vmem:[%s1136 + $0x18] sm:$0xf]
        %v1141 = vld [vmem:[%s1136 + $0x20] sm:$0xf]
        %v1142 = vld [vmem:[%s1136 + $0x28] sm:$0xf]
        %v1143 = vld [vmem:[%s1136 + $0x30] sm:$0xf]
        %v1144 = vld [vmem:[%s1136 + $0x38] sm:$0xf]
        %s1145 = scalar_lea.vmem %s1, 14
        %v1146 = vld [vmem:[%s1145] sm:$0x3]
        %v1155 = vunpack.c.l.b16 %v1137
        %v1156 = vunpack.c.l.b16 %v1138
        %v1157 = vunpack.c.l.b16 %v1139
        %v1158 = vunpack.c.l.b16 %v1140
        %v1159 = vunpack.c.l.b16 %v1141
        %v1160 = vunpack.c.l.b16 %v1142
        %v1161 = vunpack.c.l.b16 %v1143
        %v1162 = vunpack.c.l.b16 %v1144
        %v1163 = vpack.c.b16 %v1156, %v1155
        %v1164 = vpack.c.b16 %v1158, %v1157
        %v1165 = vpack.c.b16 %v1160, %v1159
        %v1166 = vpack.c.b16 %v1162, %v1161
        %v1168 = vsel %vm386, %v1163, 0
        %v1171 = vsel %vm386, %v1164, 0
        %v1174 = vsel %vm386, %v1165, 0
        %v1177 = vsel %vm386, %v1166, 0
        %v1180 = vsel %vm399, %v1146, 0
        %1182 = vmatpush.bf16.msra.mxu0 0
        %1183 = vmatpush.bf16.msra.mxu0 0
        %1184 = vmatpush.bf16.msra.mxu0 0
        %1185 = vmatpush.bf16.msra.mxu0 0
        %1186 = vmatpush.bf16.msra.mxu0 0
        %1187 = vmatpush.bf16.msra.mxu0 0
        %1188 = vmatpush.bf16.msra.mxu0 0
        %1189 = vmatpush.bf16.msra.mxu0 %v1180
        %1190 = vmatmul.bf16.gmra.mxu0 %v1168
        %v1191 = vpop.f32.mrf.mxu0
        %v1192 = vadd.f32 0.0, %v1191
        %v1193 = vpop.f32.mrf.mxu0
        %v1194 = vadd.f32 0.0, %v1193
        %1195 = vmatmul.bf16.gmra.mxu0 %v1171
        %v1196 = vpop.f32.mrf.mxu0
        %v1197 = vadd.f32 0.0, %v1196
        %v1198 = vpop.f32.mrf.mxu0
        %v1199 = vadd.f32 0.0, %v1198
        %1200 = vmatmul.bf16.gmra.mxu0 %v1174
        %v1201 = vpop.f32.mrf.mxu0
        %v1202 = vadd.f32 0.0, %v1201
        %v1203 = vpop.f32.mrf.mxu0
        %v1204 = vadd.f32 0.0, %v1203
        %1205 = vmatmul.bf16.gmra.mxu0 %v1177
        %v1206 = vpop.f32.mrf.mxu0
        %v1207 = vadd.f32 0.0, %v1206
        %v1208 = vpop.f32.mrf.mxu0
        %v1209 = vadd.f32 0.0, %v1208
        %1210 = vdwg.mxu0
        %v1211 = vadd.f32 %v1128, %v1192
        %v1212 = vadd.f32 %v1129, %v1194
        %v1213 = vadd.f32 %v1130, %v1197
        %v1214 = vadd.f32 %v1131, %v1199
        %v1215 = vadd.f32 %v1132, %v1202
        %v1216 = vadd.f32 %v1133, %v1204
        %v1217 = vadd.f32 %v1134, %v1207
        %v1218 = vadd.f32 %v1135, %v1209
        %v1219 = vld [vmem:[%s1053] sm:$0xf]
        %v1220 = vld [vmem:[%s1053 + $0x4] sm:$0x1]
        %v1221 = vld [vmem:[%s1053 + $0x8] sm:$0xf]
        %v1222 = vld [vmem:[%s1053 + $0xc] sm:$0x1]
        %v1223 = vld [vmem:[%s1053 + $0x10] sm:$0xf]
        %v1224 = vld [vmem:[%s1053 + $0x14] sm:$0x1]
        %v1225 = vld [vmem:[%s1053 + $0x18] sm:$0xf]
        %v1226 = vld [vmem:[%s1053 + $0x1c] sm:$0x1]
        %v1227 = vld [vmem:[%s1053 + $0x20] sm:$0xf]
        %v1228 = vld [vmem:[%s1053 + $0x24] sm:$0x1]
        %v1229 = vld [vmem:[%s1053 + $0x28] sm:$0xf]
        %v1230 = vld [vmem:[%s1053 + $0x2c] sm:$0x1]
        %v1231 = vld [vmem:[%s1053 + $0x30] sm:$0xf]
        %v1232 = vld [vmem:[%s1053 + $0x34] sm:$0x1]
        %v1233 = vld [vmem:[%s1053 + $0x38] sm:$0xf]
        %v1234 = vld [vmem:[%s1053 + $0x3c] sm:$0x1]
        %v1236 = vshrl.u32 %v1219, 16
        %v1238 = vrot.slane %v1236, 4
        %v1239 = vshll.u32 %v1219, 16
        %v1241 = vrot.slane %v1239, 5
        %v1242 = vor.u32 %v1238, %v1241
        %v1243 = vrot.slane %v1242, 4
        %v1245 = vshll.u32 %v1220, 16
        %v1247 = vrot.slane %v1245, 5
        %v1248 = vsel %vm514, %v1243, %v1247
        %v1250 = vshrl.u32 %v1221, 16
        %v1252 = vrot.slane %v1250, 4
        %v1253 = vshll.u32 %v1221, 16
        %v1255 = vrot.slane %v1253, 5
        %v1256 = vor.u32 %v1252, %v1255
        %v1257 = vrot.slane %v1256, 4
        %v1259 = vshll.u32 %v1222, 16
        %v1261 = vrot.slane %v1259, 5
        %v1262 = vsel %vm514, %v1257, %v1261
        %v1264 = vshrl.u32 %v1223, 16
        %v1266 = vrot.slane %v1264, 4
        %v1267 = vshll.u32 %v1223, 16
        %v1269 = vrot.slane %v1267, 5
        %v1270 = vor.u32 %v1266, %v1269
        %v1271 = vrot.slane %v1270, 4
        %v1273 = vshll.u32 %v1224, 16
        %v1275 = vrot.slane %v1273, 5
        %v1276 = vsel %vm514, %v1271, %v1275
        %v1278 = vshrl.u32 %v1225, 16
        %v1280 = vrot.slane %v1278, 4
        %v1281 = vshll.u32 %v1225, 16
        %v1283 = vrot.slane %v1281, 5
        %v1284 = vor.u32 %v1280, %v1283
        %v1285 = vrot.slane %v1284, 4
        %v1287 = vshll.u32 %v1226, 16
        %v1289 = vrot.slane %v1287, 5
        %v1290 = vsel %vm514, %v1285, %v1289
        %v1292 = vshrl.u32 %v1227, 16
        %v1294 = vrot.slane %v1292, 4
        %v1295 = vshll.u32 %v1227, 16
        %v1297 = vrot.slane %v1295, 5
        %v1298 = vor.u32 %v1294, %v1297
        %v1299 = vrot.slane %v1298, 4
        %v1301 = vshll.u32 %v1228, 16
        %v1303 = vrot.slane %v1301, 5
        %v1304 = vsel %vm514, %v1299, %v1303
        %v1306 = vshrl.u32 %v1229, 16
        %v1308 = vrot.slane %v1306, 4
        %v1309 = vshll.u32 %v1229, 16
        %v1311 = vrot.slane %v1309, 5
        %v1312 = vor.u32 %v1308, %v1311
        %v1313 = vrot.slane %v1312, 4
        %v1315 = vshll.u32 %v1230, 16
        %v1317 = vrot.slane %v1315, 5
        %v1318 = vsel %vm514, %v1313, %v1317
        %v1320 = vshrl.u32 %v1231, 16
        %v1322 = vrot.slane %v1320, 4
        %v1323 = vshll.u32 %v1231, 16
        %v1325 = vrot.slane %v1323, 5
        %v1326 = vor.u32 %v1322, %v1325
        %v1327 = vrot.slane %v1326, 4
        %v1329 = vshll.u32 %v1232, 16
        %v1331 = vrot.slane %v1329, 5
        %v1332 = vsel %vm514, %v1327, %v1331
        %v1334 = vshrl.u32 %v1233, 16
        %v1336 = vrot.slane %v1334, 4
        %v1337 = vshll.u32 %v1233, 16
        %v1339 = vrot.slane %v1337, 5
        %v1340 = vor.u32 %v1336, %v1339
        %v1341 = vrot.slane %v1340, 4
        %v1343 = vshll.u32 %v1234, 16
        %v1345 = vrot.slane %v1343, 5
        %v1346 = vsel %vm514, %v1341, %v1345
        %s1347 = scalar_lea.vmem %s1, 16
        %v1348 = vld [vmem:[%s1347] sm:$0x3]
        %v1349 = vunpack.c.l.b16 %v1248
        %v1350 = vunpack.c.l.b16 %v1262
        %v1351 = vunpack.c.l.b16 %v1276
        %v1352 = vunpack.c.l.b16 %v1290
        %v1353 = vunpack.c.l.b16 %v1304
        %v1354 = vunpack.c.l.b16 %v1318
        %v1355 = vunpack.c.l.b16 %v1332
        %v1356 = vunpack.c.l.b16 %v1346
        %v1357 = vpack.c.b16 %v1350, %v1349
        %v1358 = vpack.c.b16 %v1352, %v1351
        %v1359 = vpack.c.b16 %v1354, %v1353
        %v1360 = vpack.c.b16 %v1356, %v1355
        %v1362 = vsel %vm386, %v1357, 0
        %v1365 = vsel %vm386, %v1358, 0
        %v1368 = vsel %vm386, %v1359, 0
        %v1371 = vsel %vm386, %v1360, 0
        %v1374 = vsel %vm399, %v1348, 0
        %1376 = vmatpush.bf16.msra.mxu0 0
        %1377 = vmatpush.bf16.msra.mxu0 0
        %1378 = vmatpush.bf16.msra.mxu0 0
        %1379 = vmatpush.bf16.msra.mxu0 0
        %1380 = vmatpush.bf16.msra.mxu0 0
        %1381 = vmatpush.bf16.msra.mxu0 0
        %1382 = vmatpush.bf16.msra.mxu0 0
        %1383 = vmatpush.bf16.msra.mxu0 %v1374
        %1384 = vmatmul.bf16.gmra.mxu0 %v1362
        %v1385 = vpop.f32.mrf.mxu0
        %v1386 = vadd.f32 0.0, %v1385
        %v1387 = vpop.f32.mrf.mxu0
        %v1388 = vadd.f32 0.0, %v1387
        %1389 = vmatmul.bf16.gmra.mxu0 %v1365
        %v1390 = vpop.f32.mrf.mxu0
        %v1391 = vadd.f32 0.0, %v1390
        %v1392 = vpop.f32.mrf.mxu0
        %v1393 = vadd.f32 0.0, %v1392
        %1394 = vmatmul.bf16.gmra.mxu0 %v1368
        %v1395 = vpop.f32.mrf.mxu0
        %v1396 = vadd.f32 0.0, %v1395
        %v1397 = vpop.f32.mrf.mxu0
        %v1398 = vadd.f32 0.0, %v1397
        %1399 = vmatmul.bf16.gmra.mxu0 %v1371
        %v1400 = vpop.f32.mrf.mxu0
        %v1401 = vadd.f32 0.0, %v1400
        %v1402 = vpop.f32.mrf.mxu0
        %v1403 = vadd.f32 0.0, %v1402
        %1404 = vdwg.mxu0
        %v1405 = vadd.f32 %v1211, %v1386
        %v1406 = vadd.f32 %v1212, %v1388
        %v1407 = vadd.f32 %v1213, %v1391
        %v1408 = vadd.f32 %v1214, %v1393
        %v1409 = vadd.f32 %v1215, %v1396
        %v1410 = vadd.f32 %v1216, %v1398
        %v1411 = vadd.f32 %v1217, %v1401
        %v1412 = vadd.f32 %v1218, %v1403
        %v1413 = vld [vmem:[%s2] sm:$0x1]
        %v1415 = vperm.slane %v1413, 0
        %v1417 = vadd.f32 %v1405, %v1415
        %v1418 = vadd.f32 %v1406, %v1415
        %v1419 = vadd.f32 %v1407, %v1415
        %v1420 = vadd.f32 %v1408, %v1415
        %v1421 = vadd.f32 %v1409, %v1415
        %v1422 = vadd.f32 %v1410, %v1415
        %v1423 = vadd.f32 %v1411, %v1415
        %v1424 = vadd.f32 %v1412, %v1415
        %v1425 = vmax.f32 %v1417, 0.0
        %v1426 = vmax.f32 %v1418, 0.0
        %v1427 = vmax.f32 %v1419, 0.0
        %v1428 = vmax.f32 %v1420, 0.0
        %v1429 = vmax.f32 %v1421, 0.0
        %v1430 = vmax.f32 %v1422, 0.0
        %v1431 = vmax.f32 %v1423, 0.0
        %v1432 = vmax.f32 %v1424, 0.0
        %s1433 = scalar_lea.vmem [#allocation2], 24
        %1434 = vst [vmem:[%s1433 + $0x8] sm:$0xff] %v1425
        %1435 = vst [vmem:[%s1433 + $0x20] sm:$0xff] %v1426
        %1436 = vst [vmem:[%s1433 + $0x38] sm:$0xff] %v1427
        %1437 = vst [vmem:[%s1433 + $0x50] sm:$0xff] %v1428
        %1438 = vst [vmem:[%s1433 + $0x68] sm:$0xff] %v1429
        %1439 = vst [vmem:[%s1433 + $0x80] sm:$0xff] %v1430
        %1440 = vst [vmem:[%s1433 + $0x98] sm:$0xff] %v1431
        %1441 = vst [vmem:[%s1433 + $0xb0] sm:$0xff] %v1432
        %v1442 = vld [vmem:[#allocation2 + $0x7] sm:$0xff]
        %v1443 = vld [vmem:[#allocation2 + $0x1f] sm:$0xff]
        %v1444 = vld [vmem:[#allocation2 + $0x37] sm:$0xff]
        %v1445 = vld [vmem:[#allocation2 + $0x4f] sm:$0xff]
        %v1446 = vld [vmem:[#allocation2 + $0x67] sm:$0xff]
        %v1447 = vld [vmem:[#allocation2 + $0x7f] sm:$0xff]
        %v1448 = vld [vmem:[#allocation2 + $0x97] sm:$0xff]
        %v1449 = vld [vmem:[#allocation2 + $0xaf] sm:$0xff]
        %v1450 = vpack.c.bf16 %v1443, %v1442
        %v1451 = vpack.c.bf16 %v1445, %v1444
        %v1452 = vpack.c.bf16 %v1447, %v1446
        %v1453 = vpack.c.bf16 %v1449, %v1448
        %v1454 = vld [vmem:[%s3] sm:$0xf]
        %v1455 = vld [vmem:[%s3 + $0x4] sm:$0xf]
        %v1456 = vld [vmem:[%s3 + $0x8] sm:$0xf]
        %v1457 = vld [vmem:[%s3 + $0xc] sm:$0xf]
        %v1458 = vld [vmem:[%s3 + $0x10] sm:$0xf]
        %v1459 = vld [vmem:[%s3 + $0x14] sm:$0xf]
        %v1460 = vld [vmem:[%s3 + $0x18] sm:$0xf]
        %v1461 = vld [vmem:[%s3 + $0x1c] sm:$0xf]
        %v1462 = vld [vmem:[%s3 + $0x20] sm:$0xf]
        %v1463 = vld [vmem:[%s3 + $0x24] sm:$0xf]
        %v1464 = vld [vmem:[%s3 + $0x28] sm:$0xf]
        %v1465 = vld [vmem:[%s3 + $0x2c] sm:$0xf]
        %v1466 = vld [vmem:[%s3 + $0x30] sm:$0xf]
        %v1467 = vld [vmem:[%s3 + $0x34] sm:$0xf]
        %v1468 = vld [vmem:[%s3 + $0x38] sm:$0xf]
        %v1469 = vld [vmem:[%s3 + $0x3c] sm:$0xf]
        %v1470 = vld [vmem:[#allocation2 + $0x8] sm:$0xff]
        %v1471 = vld [vmem:[#allocation2 + $0x20] sm:$0xff]
        %v1472 = vld [vmem:[#allocation2 + $0x38] sm:$0xff]
        %v1473 = vld [vmem:[#allocation2 + $0x50] sm:$0xff]
        %v1474 = vld [vmem:[#allocation2 + $0x68] sm:$0xff]
        %v1475 = vld [vmem:[#allocation2 + $0x80] sm:$0xff]
        %v1476 = vld [vmem:[#allocation2 + $0x98] sm:$0xff]
        %v1477 = vld [vmem:[#allocation2 + $0xb0] sm:$0xff]
        %v1478 = vpack.c.bf16 %v1471, %v1470
        %v1479 = vpack.c.bf16 %v1473, %v1472
        %v1480 = vpack.c.bf16 %v1475, %v1474
        %v1481 = vpack.c.bf16 %v1477, %v1476
        %s1482 = scalar_lea.vmem %s3, 64
        %v1483 = vld [vmem:[%s1482] sm:$0xf]
        %v1484 = vld [vmem:[%s1482 + $0x4] sm:$0xf]
        %v1485 = vld [vmem:[%s1482 + $0x8] sm:$0xf]
        %v1486 = vld [vmem:[%s1482 + $0xc] sm:$0xf]
        %v1487 = vld [vmem:[%s1482 + $0x10] sm:$0xf]
        %v1488 = vld [vmem:[%s1482 + $0x14] sm:$0xf]
        %v1489 = vld [vmem:[%s1482 + $0x18] sm:$0xf]
        %v1490 = vld [vmem:[%s1482 + $0x1c] sm:$0xf]
        %v1491 = vld [vmem:[%s1482 + $0x20] sm:$0xf]
        %v1492 = vld [vmem:[%s1482 + $0x24] sm:$0xf]
        %v1493 = vld [vmem:[%s1482 + $0x28] sm:$0xf]
        %v1494 = vld [vmem:[%s1482 + $0x2c] sm:$0xf]
        %v1495 = vld [vmem:[%s1482 + $0x30] sm:$0xf]
        %v1496 = vld [vmem:[%s1482 + $0x34] sm:$0xf]
        %v1497 = vld [vmem:[%s1482 + $0x38] sm:$0xf]
        %v1498 = vld [vmem:[%s1482 + $0x3c] sm:$0xf]
        %v1515 = vunpack.c.l.b16 %v1483
        %v1516 = vunpack.c.l.b16 %v1484
        %v1517 = vunpack.c.l.b16 %v1485
        %v1518 = vunpack.c.l.b16 %v1486
        %v1519 = vunpack.c.l.b16 %v1487
        %v1520 = vunpack.c.l.b16 %v1488
        %v1521 = vunpack.c.l.b16 %v1489
        %v1522 = vunpack.c.l.b16 %v1490
        %v1523 = vunpack.c.l.b16 %v1491
        %v1524 = vunpack.c.l.b16 %v1492
        %v1525 = vunpack.c.l.b16 %v1493
        %v1526 = vunpack.c.l.b16 %v1494
        %v1527 = vunpack.c.l.b16 %v1495
        %v1528 = vunpack.c.l.b16 %v1496
        %v1529 = vunpack.c.l.b16 %v1497
        %v1530 = vunpack.c.l.b16 %v1498
        %v1531 = vpack.c.b16 %v1516, %v1515
        %v1532 = vpack.c.b16 %v1518, %v1517
        %v1533 = vpack.c.b16 %v1520, %v1519
        %v1534 = vpack.c.b16 %v1522, %v1521
        %v1535 = vpack.c.b16 %v1524, %v1523
        %v1536 = vpack.c.b16 %v1526, %v1525
        %v1537 = vpack.c.b16 %v1528, %v1527
        %v1538 = vpack.c.b16 %v1530, %v1529
        %1547 = vmatpush.bf16.msra.mxu0 %v1538
        %1548 = vmatpush.bf16.msra.mxu0 %v1537
        %1549 = vmatpush.bf16.msra.mxu0 %v1536
        %1550 = vmatpush.bf16.msra.mxu0 %v1535
        %1551 = vmatpush.bf16.msra.mxu0 %v1534
        %1552 = vmatpush.bf16.msra.mxu0 %v1533
        %1553 = vmatpush.bf16.msra.mxu0 %v1532
        %1554 = vmatpush.bf16.msra.mxu0 %v1531
        %1555 = vmatmul.bf16.gmra.mxu0 %v1478
        %v1556 = vpop.f32.mrf.mxu0
        %v1557 = vadd.f32 0.0, %v1556
        %v1558 = vpop.f32.mrf.mxu0
        %v1559 = vadd.f32 0.0, %v1558
        %1560 = vmatmul.bf16.gmra.mxu0 %v1479
        %v1561 = vpop.f32.mrf.mxu0
        %v1562 = vadd.f32 0.0, %v1561
        %v1563 = vpop.f32.mrf.mxu0
        %v1564 = vadd.f32 0.0, %v1563
        %1565 = vmatmul.bf16.gmra.mxu0 %v1480
        %v1566 = vpop.f32.mrf.mxu0
        %v1567 = vadd.f32 0.0, %v1566
        %v1568 = vpop.f32.mrf.mxu0
        %v1569 = vadd.f32 0.0, %v1568
        %1570 = vmatmul.bf16.gmra.mxu0 %v1481
        %v1571 = vpop.f32.mrf.mxu0
        %v1572 = vadd.f32 0.0, %v1571
        %v1573 = vpop.f32.mrf.mxu0
        %v1574 = vadd.f32 0.0, %v1573
        %1575 = vdwg.mxu0
        %v1592 = vunpack.c.l.b16 %v1454
        %v1593 = vunpack.c.l.b16 %v1455
        %v1594 = vunpack.c.l.b16 %v1456
        %v1595 = vunpack.c.l.b16 %v1457
        %v1596 = vunpack.c.l.b16 %v1458
        %v1597 = vunpack.c.l.b16 %v1459
        %v1598 = vunpack.c.l.b16 %v1460
        %v1599 = vunpack.c.l.b16 %v1461
        %v1600 = vunpack.c.l.b16 %v1462
        %v1601 = vunpack.c.l.b16 %v1463
        %v1602 = vunpack.c.l.b16 %v1464
        %v1603 = vunpack.c.l.b16 %v1465
        %v1604 = vunpack.c.l.b16 %v1466
        %v1605 = vunpack.c.l.b16 %v1467
        %v1606 = vunpack.c.l.b16 %v1468
        %v1607 = vunpack.c.l.b16 %v1469
        %v1608 = vpack.c.b16 %v1593, %v1592
        %v1609 = vpack.c.b16 %v1595, %v1594
        %v1610 = vpack.c.b16 %v1597, %v1596
        %v1611 = vpack.c.b16 %v1599, %v1598
        %v1612 = vpack.c.b16 %v1601, %v1600
        %v1613 = vpack.c.b16 %v1603, %v1602
        %v1614 = vpack.c.b16 %v1605, %v1604
        %v1615 = vpack.c.b16 %v1607, %v1606
        %1624 = vmatpush.bf16.msra.mxu0 %v1615
        %1625 = vmatpush.bf16.msra.mxu0 %v1614
        %1626 = vmatpush.bf16.msra.mxu0 %v1613
        %1627 = vmatpush.bf16.msra.mxu0 %v1612
        %1628 = vmatpush.bf16.msra.mxu0 %v1611
        %1629 = vmatpush.bf16.msra.mxu0 %v1610
        %1630 = vmatpush.bf16.msra.mxu0 %v1609
        %1631 = vmatpush.bf16.msra.mxu0 %v1608
        %1632 = vmatmul.bf16.gmra.mxu0 %v1450
        %v1633 = vpop.f32.mrf.mxu0
        %v1634 = vadd.f32 %v1557, %v1633
        %v1635 = vpop.f32.mrf.mxu0
        %v1636 = vadd.f32 %v1559, %v1635
        %1637 = vmatmul.bf16.gmra.mxu0 %v1451
        %v1638 = vpop.f32.mrf.mxu0
        %v1639 = vadd.f32 %v1562, %v1638
        %v1640 = vpop.f32.mrf.mxu0
        %v1641 = vadd.f32 %v1564, %v1640
        %1642 = vmatmul.bf16.gmra.mxu0 %v1452
        %v1643 = vpop.f32.mrf.mxu0
        %v1644 = vadd.f32 %v1567, %v1643
        %v1645 = vpop.f32.mrf.mxu0
        %v1646 = vadd.f32 %v1569, %v1645
        %1647 = vmatmul.bf16.gmra.mxu0 %v1453
        %v1648 = vpop.f32.mrf.mxu0
        %v1649 = vadd.f32 %v1572, %v1648
        %v1650 = vpop.f32.mrf.mxu0
        %v1651 = vadd.f32 %v1574, %v1650
        %1652 = vdwg.mxu0
        %v1653 = vld [vmem:[#allocation2 + $0x9] sm:$0xff]
        %v1654 = vld [vmem:[#allocation2 + $0x21] sm:$0xff]
        %v1655 = vld [vmem:[#allocation2 + $0x39] sm:$0xff]
        %v1656 = vld [vmem:[#allocation2 + $0x51] sm:$0xff]
        %v1657 = vld [vmem:[#allocation2 + $0x69] sm:$0xff]
        %v1658 = vld [vmem:[#allocation2 + $0x81] sm:$0xff]
        %v1659 = vld [vmem:[#allocation2 + $0x99] sm:$0xff]
        %v1660 = vld [vmem:[#allocation2 + $0xb1] sm:$0xff]
        %v1661 = vpack.c.bf16 %v1654, %v1653
        %v1662 = vpack.c.bf16 %v1656, %v1655
        %v1663 = vpack.c.bf16 %v1658, %v1657
        %v1664 = vpack.c.bf16 %v1660, %v1659
        %s1665 = scalar_lea.vmem %s3, 128
        %v1666 = vld [vmem:[%s1665] sm:$0xf]
        %v1667 = vld [vmem:[%s1665 + $0x4] sm:$0xf]
        %v1668 = vld [vmem:[%s1665 + $0x8] sm:$0xf]
        %v1669 = vld [vmem:[%s1665 + $0xc] sm:$0xf]
        %v1670 = vld [vmem:[%s1665 + $0x10] sm:$0xf]
        %v1671 = vld [vmem:[%s1665 + $0x14] sm:$0xf]
        %v1672 = vld [vmem:[%s1665 + $0x18] sm:$0xf]
        %v1673 = vld [vmem:[%s1665 + $0x1c] sm:$0xf]
        %v1674 = vld [vmem:[%s1665 + $0x20] sm:$0xf]
        %v1675 = vld [vmem:[%s1665 + $0x24] sm:$0xf]
        %v1676 = vld [vmem:[%s1665 + $0x28] sm:$0xf]
        %v1677 = vld [vmem:[%s1665 + $0x2c] sm:$0xf]
        %v1678 = vld [vmem:[%s1665 + $0x30] sm:$0xf]
        %v1679 = vld [vmem:[%s1665 + $0x34] sm:$0xf]
        %v1680 = vld [vmem:[%s1665 + $0x38] sm:$0xf]
        %v1681 = vld [vmem:[%s1665 + $0x3c] sm:$0xf]
        %v1698 = vunpack.c.l.b16 %v1666
        %v1699 = vunpack.c.l.b16 %v1667
        %v1700 = vunpack.c.l.b16 %v1668
        %v1701 = vunpack.c.l.b16 %v1669
        %v1702 = vunpack.c.l.b16 %v1670
        %v1703 = vunpack.c.l.b16 %v1671
        %v1704 = vunpack.c.l.b16 %v1672
        %v1705 = vunpack.c.l.b16 %v1673
        %v1706 = vunpack.c.l.b16 %v1674
        %v1707 = vunpack.c.l.b16 %v1675
        %v1708 = vunpack.c.l.b16 %v1676
        %v1709 = vunpack.c.l.b16 %v1677
        %v1710 = vunpack.c.l.b16 %v1678
        %v1711 = vunpack.c.l.b16 %v1679
        %v1712 = vunpack.c.l.b16 %v1680
        %v1713 = vunpack.c.l.b16 %v1681
        %v1714 = vpack.c.b16 %v1699, %v1698
        %v1715 = vpack.c.b16 %v1701, %v1700
        %v1716 = vpack.c.b16 %v1703, %v1702
        %v1717 = vpack.c.b16 %v1705, %v1704
        %v1718 = vpack.c.b16 %v1707, %v1706
        %v1719 = vpack.c.b16 %v1709, %v1708
        %v1720 = vpack.c.b16 %v1711, %v1710
        %v1721 = vpack.c.b16 %v1713, %v1712
        %1730 = vmatpush.bf16.msra.mxu0 %v1721
        %1731 = vmatpush.bf16.msra.mxu0 %v1720
        %1732 = vmatpush.bf16.msra.mxu0 %v1719
        %1733 = vmatpush.bf16.msra.mxu0 %v1718
        %1734 = vmatpush.bf16.msra.mxu0 %v1717
        %1735 = vmatpush.bf16.msra.mxu0 %v1716
        %1736 = vmatpush.bf16.msra.mxu0 %v1715
        %1737 = vmatpush.bf16.msra.mxu0 %v1714
        %1738 = vmatmul.bf16.gmra.mxu0 %v1661
        %v1739 = vpop.f32.mrf.mxu0
        %v1740 = vadd.f32 0.0, %v1739
        %v1741 = vpop.f32.mrf.mxu0
        %v1742 = vadd.f32 0.0, %v1741
        %1743 = vmatmul.bf16.gmra.mxu0 %v1662
        %v1744 = vpop.f32.mrf.mxu0
        %v1745 = vadd.f32 0.0, %v1744
        %v1746 = vpop.f32.mrf.mxu0
        %v1747 = vadd.f32 0.0, %v1746
        %1748 = vmatmul.bf16.gmra.mxu0 %v1663
        %v1749 = vpop.f32.mrf.mxu0
        %v1750 = vadd.f32 0.0, %v1749
        %v1751 = vpop.f32.mrf.mxu0
        %v1752 = vadd.f32 0.0, %v1751
        %1753 = vmatmul.bf16.gmra.mxu0 %v1664
        %v1754 = vpop.f32.mrf.mxu0
        %v1755 = vadd.f32 0.0, %v1754
        %v1756 = vpop.f32.mrf.mxu0
        %v1757 = vadd.f32 0.0, %v1756
        %1758 = vdwg.mxu0
        %v1759 = vadd.f32 %v1634, %v1740
        %v1760 = vadd.f32 %v1636, %v1742
        %v1761 = vadd.f32 %v1639, %v1745
        %v1762 = vadd.f32 %v1641, %v1747
        %v1763 = vadd.f32 %v1644, %v1750
        %v1764 = vadd.f32 %v1646, %v1752
        %v1765 = vadd.f32 %v1649, %v1755
        %v1766 = vadd.f32 %v1651, %v1757
        %v1767 = vld [vmem:[%s1433 + $0x7] sm:$0xff]
        %v1768 = vld [vmem:[%s1433 + $0x1f] sm:$0xff]
        %v1769 = vld [vmem:[%s1433 + $0x37] sm:$0xff]
        %v1770 = vld [vmem:[%s1433 + $0x4f] sm:$0xff]
        %v1771 = vld [vmem:[%s1433 + $0x67] sm:$0xff]
        %v1772 = vld [vmem:[%s1433 + $0x7f] sm:$0xff]
        %v1773 = vld [vmem:[%s1433 + $0x97] sm:$0xff]
        %v1774 = vld [vmem:[%s1433 + $0xaf] sm:$0xff]
        %v1775 = vpack.c.bf16 %v1768, %v1767
        %v1776 = vpack.c.bf16 %v1770, %v1769
        %v1777 = vpack.c.bf16 %v1772, %v1771
        %v1778 = vpack.c.bf16 %v1774, %v1773
        %s1779 = scalar_lea.vmem %s3, 192
        %v1780 = vld [vmem:[%s1779] sm:$0xf]
        %v1781 = vld [vmem:[%s1779 + $0x4] sm:$0xf]
        %v1782 = vld [vmem:[%s1779 + $0x8] sm:$0xf]
        %v1783 = vld [vmem:[%s1779 + $0xc] sm:$0xf]
        %v1784 = vld [vmem:[%s1779 + $0x10] sm:$0xf]
        %v1785 = vld [vmem:[%s1779 + $0x14] sm:$0xf]
        %v1786 = vld [vmem:[%s1779 + $0x18] sm:$0xf]
        %v1787 = vld [vmem:[%s1779 + $0x1c] sm:$0xf]
        %v1788 = vld [vmem:[%s1779 + $0x20] sm:$0xf]
        %v1789 = vld [vmem:[%s1779 + $0x24] sm:$0xf]
        %v1790 = vld [vmem:[%s1779 + $0x28] sm:$0xf]
        %v1791 = vld [vmem:[%s1779 + $0x2c] sm:$0xf]
        %v1792 = vld [vmem:[%s1779 + $0x30] sm:$0xf]
        %v1793 = vld [vmem:[%s1779 + $0x34] sm:$0xf]
        %v1794 = vld [vmem:[%s1779 + $0x38] sm:$0xf]
        %v1795 = vld [vmem:[%s1779 + $0x3c] sm:$0xf]
        %v1812 = vunpack.c.l.b16 %v1780
        %v1813 = vunpack.c.l.b16 %v1781
        %v1814 = vunpack.c.l.b16 %v1782
        %v1815 = vunpack.c.l.b16 %v1783
        %v1816 = vunpack.c.l.b16 %v1784
        %v1817 = vunpack.c.l.b16 %v1785
        %v1818 = vunpack.c.l.b16 %v1786
        %v1819 = vunpack.c.l.b16 %v1787
        %v1820 = vunpack.c.l.b16 %v1788
        %v1821 = vunpack.c.l.b16 %v1789
        %v1822 = vunpack.c.l.b16 %v1790
        %v1823 = vunpack.c.l.b16 %v1791
        %v1824 = vunpack.c.l.b16 %v1792
        %v1825 = vunpack.c.l.b16 %v1793
        %v1826 = vunpack.c.l.b16 %v1794
        %v1827 = vunpack.c.l.b16 %v1795
        %v1828 = vpack.c.b16 %v1813, %v1812
        %v1829 = vpack.c.b16 %v1815, %v1814
        %v1830 = vpack.c.b16 %v1817, %v1816
        %v1831 = vpack.c.b16 %v1819, %v1818
        %v1832 = vpack.c.b16 %v1821, %v1820
        %v1833 = vpack.c.b16 %v1823, %v1822
        %v1834 = vpack.c.b16 %v1825, %v1824
        %v1835 = vpack.c.b16 %v1827, %v1826
        %1844 = vmatpush.bf16.msra.mxu0 %v1835
        %1845 = vmatpush.bf16.msra.mxu0 %v1834
        %1846 = vmatpush.bf16.msra.mxu0 %v1833
        %1847 = vmatpush.bf16.msra.mxu0 %v1832
        %1848 = vmatpush.bf16.msra.mxu0 %v1831
        %1849 = vmatpush.bf16.msra.mxu0 %v1830
        %1850 = vmatpush.bf16.msra.mxu0 %v1829
        %1851 = vmatpush.bf16.msra.mxu0 %v1828
        %1852 = vmatmul.bf16.gmra.mxu0 %v1775
        %v1853 = vpop.f32.mrf.mxu0
        %v1854 = vadd.f32 0.0, %v1853
        %v1855 = vpop.f32.mrf.mxu0
        %v1856 = vadd.f32 0.0, %v1855
        %1857 = vmatmul.bf16.gmra.mxu0 %v1776
        %v1858 = vpop.f32.mrf.mxu0
        %v1859 = vadd.f32 0.0, %v1858
        %v1860 = vpop.f32.mrf.mxu0
        %v1861 = vadd.f32 0.0, %v1860
        %1862 = vmatmul.bf16.gmra.mxu0 %v1777
        %v1863 = vpop.f32.mrf.mxu0
        %v1864 = vadd.f32 0.0, %v1863
        %v1865 = vpop.f32.mrf.mxu0
        %v1866 = vadd.f32 0.0, %v1865
        %1867 = vmatmul.bf16.gmra.mxu0 %v1778
        %v1868 = vpop.f32.mrf.mxu0
        %v1869 = vadd.f32 0.0, %v1868
        %v1870 = vpop.f32.mrf.mxu0
        %v1871 = vadd.f32 0.0, %v1870
        %1872 = vdwg.mxu0
        %v1873 = vadd.f32 %v1759, %v1854
        %v1874 = vadd.f32 %v1760, %v1856
        %v1875 = vadd.f32 %v1761, %v1859
        %v1876 = vadd.f32 %v1762, %v1861
        %v1877 = vadd.f32 %v1763, %v1864
        %v1878 = vadd.f32 %v1764, %v1866
        %v1879 = vadd.f32 %v1765, %v1869
        %v1880 = vadd.f32 %v1766, %v1871
        %v1881 = vld [vmem:[%s1433 + $0x8] sm:$0xff]
        %v1882 = vld [vmem:[%s1433 + $0x20] sm:$0xff]
        %v1883 = vld [vmem:[%s1433 + $0x38] sm:$0xff]
        %v1884 = vld [vmem:[%s1433 + $0x50] sm:$0xff]
        %v1885 = vld [vmem:[%s1433 + $0x68] sm:$0xff]
        %v1886 = vld [vmem:[%s1433 + $0x80] sm:$0xff]
        %v1887 = vld [vmem:[%s1433 + $0x98] sm:$0xff]
        %v1888 = vld [vmem:[%s1433 + $0xb0] sm:$0xff]
        %v1889 = vpack.c.bf16 %v1882, %v1881
        %v1890 = vpack.c.bf16 %v1884, %v1883
        %v1891 = vpack.c.bf16 %v1886, %v1885
        %v1892 = vpack.c.bf16 %v1888, %v1887
        %s1893 = scalar_lea.vmem %s3, 256
        %v1894 = vld [vmem:[%s1893] sm:$0xf]
        %v1895 = vld [vmem:[%s1893 + $0x4] sm:$0xf]
        %v1896 = vld [vmem:[%s1893 + $0x8] sm:$0xf]
        %v1897 = vld [vmem:[%s1893 + $0xc] sm:$0xf]
        %v1898 = vld [vmem:[%s1893 + $0x10] sm:$0xf]
        %v1899 = vld [vmem:[%s1893 + $0x14] sm:$0xf]
        %v1900 = vld [vmem:[%s1893 + $0x18] sm:$0xf]
        %v1901 = vld [vmem:[%s1893 + $0x1c] sm:$0xf]
        %v1902 = vld [vmem:[%s1893 + $0x20] sm:$0xf]
        %v1903 = vld [vmem:[%s1893 + $0x24] sm:$0xf]
        %v1904 = vld [vmem:[%s1893 + $0x28] sm:$0xf]
        %v1905 = vld [vmem:[%s1893 + $0x2c] sm:$0xf]
        %v1906 = vld [vmem:[%s1893 + $0x30] sm:$0xf]
        %v1907 = vld [vmem:[%s1893 + $0x34] sm:$0xf]
        %v1908 = vld [vmem:[%s1893 + $0x38] sm:$0xf]
        %v1909 = vld [vmem:[%s1893 + $0x3c] sm:$0xf]
        %v1926 = vunpack.c.l.b16 %v1894
        %v1927 = vunpack.c.l.b16 %v1895
        %v1928 = vunpack.c.l.b16 %v1896
        %v1929 = vunpack.c.l.b16 %v1897
        %v1930 = vunpack.c.l.b16 %v1898
        %v1931 = vunpack.c.l.b16 %v1899
        %v1932 = vunpack.c.l.b16 %v1900
        %v1933 = vunpack.c.l.b16 %v1901
        %v1934 = vunpack.c.l.b16 %v1902
        %v1935 = vunpack.c.l.b16 %v1903
        %v1936 = vunpack.c.l.b16 %v1904
        %v1937 = vunpack.c.l.b16 %v1905
        %v1938 = vunpack.c.l.b16 %v1906
        %v1939 = vunpack.c.l.b16 %v1907
        %v1940 = vunpack.c.l.b16 %v1908
        %v1941 = vunpack.c.l.b16 %v1909
        %v1942 = vpack.c.b16 %v1927, %v1926
        %v1943 = vpack.c.b16 %v1929, %v1928
        %v1944 = vpack.c.b16 %v1931, %v1930
        %v1945 = vpack.c.b16 %v1933, %v1932
        %v1946 = vpack.c.b16 %v1935, %v1934
        %v1947 = vpack.c.b16 %v1937, %v1936
        %v1948 = vpack.c.b16 %v1939, %v1938
        %v1949 = vpack.c.b16 %v1941, %v1940
        %1958 = vmatpush.bf16.msra.mxu0 %v1949
        %1959 = vmatpush.bf16.msra.mxu0 %v1948
        %1960 = vmatpush.bf16.msra.mxu0 %v1947
        %1961 = vmatpush.bf16.msra.mxu0 %v1946
        %1962 = vmatpush.bf16.msra.mxu0 %v1945
        %1963 = vmatpush.bf16.msra.mxu0 %v1944
        %1964 = vmatpush.bf16.msra.mxu0 %v1943
        %1965 = vmatpush.bf16.msra.mxu0 %v1942
        %1966 = vmatmul.bf16.gmra.mxu0 %v1889
        %v1967 = vpop.f32.mrf.mxu0
        %v1968 = vadd.f32 0.0, %v1967
        %v1969 = vpop.f32.mrf.mxu0
        %v1970 = vadd.f32 0.0, %v1969
        %1971 = vmatmul.bf16.gmra.mxu0 %v1890
        %v1972 = vpop.f32.mrf.mxu0
        %v1973 = vadd.f32 0.0, %v1972
        %v1974 = vpop.f32.mrf.mxu0
        %v1975 = vadd.f32 0.0, %v1974
        %1976 = vmatmul.bf16.gmra.mxu0 %v1891
        %v1977 = vpop.f32.mrf.mxu0
        %v1978 = vadd.f32 0.0, %v1977
        %v1979 = vpop.f32.mrf.mxu0
        %v1980 = vadd.f32 0.0, %v1979
        %1981 = vmatmul.bf16.gmra.mxu0 %v1892
        %v1982 = vpop.f32.mrf.mxu0
        %v1983 = vadd.f32 0.0, %v1982
        %v1984 = vpop.f32.mrf.mxu0
        %v1985 = vadd.f32 0.0, %v1984
        %1986 = vdwg.mxu0
        %v1987 = vadd.f32 %v1873, %v1968
        %v1988 = vadd.f32 %v1874, %v1970
        %v1989 = vadd.f32 %v1875, %v1973
        %v1990 = vadd.f32 %v1876, %v1975
        %v1991 = vadd.f32 %v1877, %v1978
        %v1992 = vadd.f32 %v1878, %v1980
        %v1993 = vadd.f32 %v1879, %v1983
        %v1994 = vadd.f32 %v1880, %v1985
        %v1995 = vld [vmem:[%s1433 + $0x9] sm:$0xff]
        %v1996 = vld [vmem:[%s1433 + $0x21] sm:$0xff]
        %v1997 = vld [vmem:[%s1433 + $0x39] sm:$0xff]
        %v1998 = vld [vmem:[%s1433 + $0x51] sm:$0xff]
        %v1999 = vld [vmem:[%s1433 + $0x69] sm:$0xff]
        %v2000 = vld [vmem:[%s1433 + $0x81] sm:$0xff]
        %v2001 = vld [vmem:[%s1433 + $0x99] sm:$0xff]
        %v2002 = vld [vmem:[%s1433 + $0xb1] sm:$0xff]
        %v2003 = vpack.c.bf16 %v1996, %v1995
        %v2004 = vpack.c.bf16 %v1998, %v1997
        %v2005 = vpack.c.bf16 %v2000, %v1999
        %v2006 = vpack.c.bf16 %v2002, %v2001
        %s2007 = scalar_lea.vmem %s3, 320
        %v2008 = vld [vmem:[%s2007] sm:$0xf]
        %v2009 = vld [vmem:[%s2007 + $0x4] sm:$0xf]
        %v2010 = vld [vmem:[%s2007 + $0x8] sm:$0xf]
        %v2011 = vld [vmem:[%s2007 + $0xc] sm:$0xf]
        %v2012 = vld [vmem:[%s2007 + $0x10] sm:$0xf]
        %v2013 = vld [vmem:[%s2007 + $0x14] sm:$0xf]
        %v2014 = vld [vmem:[%s2007 + $0x18] sm:$0xf]
        %v2015 = vld [vmem:[%s2007 + $0x1c] sm:$0xf]
        %v2016 = vld [vmem:[%s2007 + $0x20] sm:$0xf]
        %v2017 = vld [vmem:[%s2007 + $0x24] sm:$0xf]
        %v2018 = vld [vmem:[%s2007 + $0x28] sm:$0xf]
        %v2019 = vld [vmem:[%s2007 + $0x2c] sm:$0xf]
        %v2020 = vld [vmem:[%s2007 + $0x30] sm:$0xf]
        %v2021 = vld [vmem:[%s2007 + $0x34] sm:$0xf]
        %v2022 = vld [vmem:[%s2007 + $0x38] sm:$0xf]
        %v2023 = vld [vmem:[%s2007 + $0x3c] sm:$0xf]
        %v2040 = vunpack.c.l.b16 %v2008
        %v2041 = vunpack.c.l.b16 %v2009
        %v2042 = vunpack.c.l.b16 %v2010
        %v2043 = vunpack.c.l.b16 %v2011
        %v2044 = vunpack.c.l.b16 %v2012
        %v2045 = vunpack.c.l.b16 %v2013
        %v2046 = vunpack.c.l.b16 %v2014
        %v2047 = vunpack.c.l.b16 %v2015
        %v2048 = vunpack.c.l.b16 %v2016
        %v2049 = vunpack.c.l.b16 %v2017
        %v2050 = vunpack.c.l.b16 %v2018
        %v2051 = vunpack.c.l.b16 %v2019
        %v2052 = vunpack.c.l.b16 %v2020
        %v2053 = vunpack.c.l.b16 %v2021
        %v2054 = vunpack.c.l.b16 %v2022
        %v2055 = vunpack.c.l.b16 %v2023
        %v2056 = vpack.c.b16 %v2041, %v2040
        %v2057 = vpack.c.b16 %v2043, %v2042
        %v2058 = vpack.c.b16 %v2045, %v2044
        %v2059 = vpack.c.b16 %v2047, %v2046
        %v2060 = vpack.c.b16 %v2049, %v2048
        %v2061 = vpack.c.b16 %v2051, %v2050
        %v2062 = vpack.c.b16 %v2053, %v2052
        %v2063 = vpack.c.b16 %v2055, %v2054
        %2072 = vmatpush.bf16.msra.mxu0 %v2063
        %2073 = vmatpush.bf16.msra.mxu0 %v2062
        %2074 = vmatpush.bf16.msra.mxu0 %v2061
        %2075 = vmatpush.bf16.msra.mxu0 %v2060
        %2076 = vmatpush.bf16.msra.mxu0 %v2059
        %2077 = vmatpush.bf16.msra.mxu0 %v2058
        %2078 = vmatpush.bf16.msra.mxu0 %v2057
        %2079 = vmatpush.bf16.msra.mxu0 %v2056
        %2080 = vmatmul.bf16.gmra.mxu0 %v2003
        %v2081 = vpop.f32.mrf.mxu0
        %v2082 = vadd.f32 0.0, %v2081
        %v2083 = vpop.f32.mrf.mxu0
        %v2084 = vadd.f32 0.0, %v2083
        %2085 = vmatmul.bf16.gmra.mxu0 %v2004
        %v2086 = vpop.f32.mrf.mxu0
        %v2087 = vadd.f32 0.0, %v2086
        %v2088 = vpop.f32.mrf.mxu0
        %v2089 = vadd.f32 0.0, %v2088
        %2090 = vmatmul.bf16.gmra.mxu0 %v2005
        %v2091 = vpop.f32.mrf.mxu0
        %v2092 = vadd.f32 0.0, %v2091
        %v2093 = vpop.f32.mrf.mxu0
        %v2094 = vadd.f32 0.0, %v2093
        %2095 = vmatmul.bf16.gmra.mxu0 %v2006
        %v2096 = vpop.f32.mrf.mxu0
        %v2097 = vadd.f32 0.0, %v2096
        %v2098 = vpop.f32.mrf.mxu0
        %v2099 = vadd.f32 0.0, %v2098
        %2100 = vdwg.mxu0
        %v2101 = vadd.f32 %v1987, %v2082
        %v2102 = vadd.f32 %v1988, %v2084
        %v2103 = vadd.f32 %v1989, %v2087
        %v2104 = vadd.f32 %v1990, %v2089
        %v2105 = vadd.f32 %v1991, %v2092
        %v2106 = vadd.f32 %v1992, %v2094
        %v2107 = vadd.f32 %v1993, %v2097
        %v2108 = vadd.f32 %v1994, %v2099
        %s2109 = scalar_lea.vmem [#allocation2], 48
        %v2110 = vld [vmem:[%s2109 + $0x7] sm:$0xff]
        %v2111 = vld [vmem:[%s2109 + $0x1f] sm:$0xff]
        %v2112 = vld [vmem:[%s2109 + $0x37] sm:$0xff]
        %v2113 = vld [vmem:[%s2109 + $0x4f] sm:$0xff]
        %v2114 = vld [vmem:[%s2109 + $0x67] sm:$0xff]
        %v2115 = vld [vmem:[%s2109 + $0x7f] sm:$0xff]
        %v2116 = vld [vmem:[%s2109 + $0x97] sm:$0xff]
        %v2117 = vld [vmem:[%s2109 + $0xaf] sm:$0xff]
        %v2118 = vpack.c.bf16 %v2111, %v2110
        %v2119 = vpack.c.bf16 %v2113, %v2112
        %v2120 = vpack.c.bf16 %v2115, %v2114
        %v2121 = vpack.c.bf16 %v2117, %v2116
        %s2122 = scalar_lea.vmem %s3, 384
        %v2123 = vld [vmem:[%s2122] sm:$0xf]
        %v2124 = vld [vmem:[%s2122 + $0x4] sm:$0xf]
        %v2125 = vld [vmem:[%s2122 + $0x8] sm:$0xf]
        %v2126 = vld [vmem:[%s2122 + $0xc] sm:$0xf]
        %v2127 = vld [vmem:[%s2122 + $0x10] sm:$0xf]
        %v2128 = vld [vmem:[%s2122 + $0x14] sm:$0xf]
        %v2129 = vld [vmem:[%s2122 + $0x18] sm:$0xf]
        %v2130 = vld [vmem:[%s2122 + $0x1c] sm:$0xf]
        %v2131 = vld [vmem:[%s2122 + $0x20] sm:$0xf]
        %v2132 = vld [vmem:[%s2122 + $0x24] sm:$0xf]
        %v2133 = vld [vmem:[%s2122 + $0x28] sm:$0xf]
        %v2134 = vld [vmem:[%s2122 + $0x2c] sm:$0xf]
        %v2135 = vld [vmem:[%s2122 + $0x30] sm:$0xf]
        %v2136 = vld [vmem:[%s2122 + $0x34] sm:$0xf]
        %v2137 = vld [vmem:[%s2122 + $0x38] sm:$0xf]
        %v2138 = vld [vmem:[%s2122 + $0x3c] sm:$0xf]
        %v2155 = vunpack.c.l.b16 %v2123
        %v2156 = vunpack.c.l.b16 %v2124
        %v2157 = vunpack.c.l.b16 %v2125
        %v2158 = vunpack.c.l.b16 %v2126
        %v2159 = vunpack.c.l.b16 %v2127
        %v2160 = vunpack.c.l.b16 %v2128
        %v2161 = vunpack.c.l.b16 %v2129
        %v2162 = vunpack.c.l.b16 %v2130
        %v2163 = vunpack.c.l.b16 %v2131
        %v2164 = vunpack.c.l.b16 %v2132
        %v2165 = vunpack.c.l.b16 %v2133
        %v2166 = vunpack.c.l.b16 %v2134
        %v2167 = vunpack.c.l.b16 %v2135
        %v2168 = vunpack.c.l.b16 %v2136
        %v2169 = vunpack.c.l.b16 %v2137
        %v2170 = vunpack.c.l.b16 %v2138
        %v2171 = vpack.c.b16 %v2156, %v2155
        %v2172 = vpack.c.b16 %v2158, %v2157
        %v2173 = vpack.c.b16 %v2160, %v2159
        %v2174 = vpack.c.b16 %v2162, %v2161
        %v2175 = vpack.c.b16 %v2164, %v2163
        %v2176 = vpack.c.b16 %v2166, %v2165
        %v2177 = vpack.c.b16 %v2168, %v2167
        %v2178 = vpack.c.b16 %v2170, %v2169
        %2187 = vmatpush.bf16.msra.mxu0 %v2178
        %2188 = vmatpush.bf16.msra.mxu0 %v2177
        %2189 = vmatpush.bf16.msra.mxu0 %v2176
        %2190 = vmatpush.bf16.msra.mxu0 %v2175
        %2191 = vmatpush.bf16.msra.mxu0 %v2174
        %2192 = vmatpush.bf16.msra.mxu0 %v2173
        %2193 = vmatpush.bf16.msra.mxu0 %v2172
        %2194 = vmatpush.bf16.msra.mxu0 %v2171
        %2195 = vmatmul.bf16.gmra.mxu0 %v2118
        %v2196 = vpop.f32.mrf.mxu0
        %v2197 = vadd.f32 0.0, %v2196
        %v2198 = vpop.f32.mrf.mxu0
        %v2199 = vadd.f32 0.0, %v2198
        %2200 = vmatmul.bf16.gmra.mxu0 %v2119
        %v2201 = vpop.f32.mrf.mxu0
        %v2202 = vadd.f32 0.0, %v2201
        %v2203 = vpop.f32.mrf.mxu0
        %v2204 = vadd.f32 0.0, %v2203
        %2205 = vmatmul.bf16.gmra.mxu0 %v2120
        %v2206 = vpop.f32.mrf.mxu0
        %v2207 = vadd.f32 0.0, %v2206
        %v2208 = vpop.f32.mrf.mxu0
        %v2209 = vadd.f32 0.0, %v2208
        %2210 = vmatmul.bf16.gmra.mxu0 %v2121
        %v2211 = vpop.f32.mrf.mxu0
        %v2212 = vadd.f32 0.0, %v2211
        %v2213 = vpop.f32.mrf.mxu0
        %v2214 = vadd.f32 0.0, %v2213
        %2215 = vdwg.mxu0
        %v2216 = vadd.f32 %v2101, %v2197
        %v2217 = vadd.f32 %v2102, %v2199
        %v2218 = vadd.f32 %v2103, %v2202
        %v2219 = vadd.f32 %v2104, %v2204
        %v2220 = vadd.f32 %v2105, %v2207
        %v2221 = vadd.f32 %v2106, %v2209
        %v2222 = vadd.f32 %v2107, %v2212
        %v2223 = vadd.f32 %v2108, %v2214
        %v2224 = vld [vmem:[%s2109 + $0x8] sm:$0xff]
        %v2225 = vld [vmem:[%s2109 + $0x20] sm:$0xff]
        %v2226 = vld [vmem:[%s2109 + $0x38] sm:$0xff]
        %v2227 = vld [vmem:[%s2109 + $0x50] sm:$0xff]
        %v2228 = vld [vmem:[%s2109 + $0x68] sm:$0xff]
        %v2229 = vld [vmem:[%s2109 + $0x80] sm:$0xff]
        %v2230 = vld [vmem:[%s2109 + $0x98] sm:$0xff]
        %v2231 = vld [vmem:[%s2109 + $0xb0] sm:$0xff]
        %v2232 = vpack.c.bf16 %v2225, %v2224
        %v2233 = vpack.c.bf16 %v2227, %v2226
        %v2234 = vpack.c.bf16 %v2229, %v2228
        %v2235 = vpack.c.bf16 %v2231, %v2230
        %s2236 = scalar_lea.vmem %s3, 448
        %v2237 = vld [vmem:[%s2236] sm:$0xf]
        %v2238 = vld [vmem:[%s2236 + $0x4] sm:$0xf]
        %v2239 = vld [vmem:[%s2236 + $0x8] sm:$0xf]
        %v2240 = vld [vmem:[%s2236 + $0xc] sm:$0xf]
        %v2241 = vld [vmem:[%s2236 + $0x10] sm:$0xf]
        %v2242 = vld [vmem:[%s2236 + $0x14] sm:$0xf]
        %v2243 = vld [vmem:[%s2236 + $0x18] sm:$0xf]
        %v2244 = vld [vmem:[%s2236 + $0x1c] sm:$0xf]
        %v2245 = vld [vmem:[%s2236 + $0x20] sm:$0xf]
        %v2246 = vld [vmem:[%s2236 + $0x24] sm:$0xf]
        %v2247 = vld [vmem:[%s2236 + $0x28] sm:$0xf]
        %v2248 = vld [vmem:[%s2236 + $0x2c] sm:$0xf]
        %v2249 = vld [vmem:[%s2236 + $0x30] sm:$0xf]
        %v2250 = vld [vmem:[%s2236 + $0x34] sm:$0xf]
        %v2251 = vld [vmem:[%s2236 + $0x38] sm:$0xf]
        %v2252 = vld [vmem:[%s2236 + $0x3c] sm:$0xf]
        %v2269 = vunpack.c.l.b16 %v2237
        %v2270 = vunpack.c.l.b16 %v2238
        %v2271 = vunpack.c.l.b16 %v2239
        %v2272 = vunpack.c.l.b16 %v2240
        %v2273 = vunpack.c.l.b16 %v2241
        %v2274 = vunpack.c.l.b16 %v2242
        %v2275 = vunpack.c.l.b16 %v2243
        %v2276 = vunpack.c.l.b16 %v2244
        %v2277 = vunpack.c.l.b16 %v2245
        %v2278 = vunpack.c.l.b16 %v2246
        %v2279 = vunpack.c.l.b16 %v2247
        %v2280 = vunpack.c.l.b16 %v2248
        %v2281 = vunpack.c.l.b16 %v2249
        %v2282 = vunpack.c.l.b16 %v2250
        %v2283 = vunpack.c.l.b16 %v2251
        %v2284 = vunpack.c.l.b16 %v2252
        %v2285 = vpack.c.b16 %v2270, %v2269
        %v2286 = vpack.c.b16 %v2272, %v2271
        %v2287 = vpack.c.b16 %v2274, %v2273
        %v2288 = vpack.c.b16 %v2276, %v2275
        %v2289 = vpack.c.b16 %v2278, %v2277
        %v2290 = vpack.c.b16 %v2280, %v2279
        %v2291 = vpack.c.b16 %v2282, %v2281
        %v2292 = vpack.c.b16 %v2284, %v2283
        %2301 = vmatpush.bf16.msra.mxu0 %v2292
        %2302 = vmatpush.bf16.msra.mxu0 %v2291
        %2303 = vmatpush.bf16.msra.mxu0 %v2290
        %2304 = vmatpush.bf16.msra.mxu0 %v2289
        %2305 = vmatpush.bf16.msra.mxu0 %v2288
        %2306 = vmatpush.bf16.msra.mxu0 %v2287
        %2307 = vmatpush.bf16.msra.mxu0 %v2286
        %2308 = vmatpush.bf16.msra.mxu0 %v2285
        %2309 = vmatmul.bf16.gmra.mxu0 %v2232
        %v2310 = vpop.f32.mrf.mxu0
        %v2311 = vadd.f32 0.0, %v2310
        %v2312 = vpop.f32.mrf.mxu0
        %v2313 = vadd.f32 0.0, %v2312
        %2314 = vmatmul.bf16.gmra.mxu0 %v2233
        %v2315 = vpop.f32.mrf.mxu0
        %v2316 = vadd.f32 0.0, %v2315
        %v2317 = vpop.f32.mrf.mxu0
        %v2318 = vadd.f32 0.0, %v2317
        %2319 = vmatmul.bf16.gmra.mxu0 %v2234
        %v2320 = vpop.f32.mrf.mxu0
        %v2321 = vadd.f32 0.0, %v2320
        %v2322 = vpop.f32.mrf.mxu0
        %v2323 = vadd.f32 0.0, %v2322
        %2324 = vmatmul.bf16.gmra.mxu0 %v2235
        %v2325 = vpop.f32.mrf.mxu0
        %v2326 = vadd.f32 0.0, %v2325
        %v2327 = vpop.f32.mrf.mxu0
        %v2328 = vadd.f32 0.0, %v2327
        %2329 = vdwg.mxu0
        %v2330 = vadd.f32 %v2216, %v2311
        %v2331 = vadd.f32 %v2217, %v2313
        %v2332 = vadd.f32 %v2218, %v2316
        %v2333 = vadd.f32 %v2219, %v2318
        %v2334 = vadd.f32 %v2220, %v2321
        %v2335 = vadd.f32 %v2221, %v2323
        %v2336 = vadd.f32 %v2222, %v2326
        %v2337 = vadd.f32 %v2223, %v2328
        %v2338 = vld [vmem:[%s2109 + $0x9] sm:$0xff]
        %v2339 = vld [vmem:[%s2109 + $0x21] sm:$0xff]
        %v2340 = vld [vmem:[%s2109 + $0x39] sm:$0xff]
        %v2341 = vld [vmem:[%s2109 + $0x51] sm:$0xff]
        %v2342 = vld [vmem:[%s2109 + $0x69] sm:$0xff]
        %v2343 = vld [vmem:[%s2109 + $0x81] sm:$0xff]
        %v2344 = vld [vmem:[%s2109 + $0x99] sm:$0xff]
        %v2345 = vld [vmem:[%s2109 + $0xb1] sm:$0xff]
        %v2346 = vpack.c.bf16 %v2339, %v2338
        %v2347 = vpack.c.bf16 %v2341, %v2340
        %v2348 = vpack.c.bf16 %v2343, %v2342
        %v2349 = vpack.c.bf16 %v2345, %v2344
        %s2350 = scalar_lea.vmem %s3, 512
        %v2351 = vld [vmem:[%s2350] sm:$0xf]
        %v2352 = vld [vmem:[%s2350 + $0x4] sm:$0xf]
        %v2353 = vld [vmem:[%s2350 + $0x8] sm:$0xf]
        %v2354 = vld [vmem:[%s2350 + $0xc] sm:$0xf]
        %v2355 = vld [vmem:[%s2350 + $0x10] sm:$0xf]
        %v2356 = vld [vmem:[%s2350 + $0x14] sm:$0xf]
        %v2357 = vld [vmem:[%s2350 + $0x18] sm:$0xf]
        %v2358 = vld [vmem:[%s2350 + $0x1c] sm:$0xf]
        %v2359 = vld [vmem:[%s2350 + $0x20] sm:$0xf]
        %v2360 = vld [vmem:[%s2350 + $0x24] sm:$0xf]
        %v2361 = vld [vmem:[%s2350 + $0x28] sm:$0xf]
        %v2362 = vld [vmem:[%s2350 + $0x2c] sm:$0xf]
        %v2363 = vld [vmem:[%s2350 + $0x30] sm:$0xf]
        %v2364 = vld [vmem:[%s2350 + $0x34] sm:$0xf]
        %v2365 = vld [vmem:[%s2350 + $0x38] sm:$0xf]
        %v2366 = vld [vmem:[%s2350 + $0x3c] sm:$0xf]
        %v2383 = vunpack.c.l.b16 %v2351
        %v2384 = vunpack.c.l.b16 %v2352
        %v2385 = vunpack.c.l.b16 %v2353
        %v2386 = vunpack.c.l.b16 %v2354
        %v2387 = vunpack.c.l.b16 %v2355
        %v2388 = vunpack.c.l.b16 %v2356
        %v2389 = vunpack.c.l.b16 %v2357
        %v2390 = vunpack.c.l.b16 %v2358
        %v2391 = vunpack.c.l.b16 %v2359
        %v2392 = vunpack.c.l.b16 %v2360
        %v2393 = vunpack.c.l.b16 %v2361
        %v2394 = vunpack.c.l.b16 %v2362
        %v2395 = vunpack.c.l.b16 %v2363
        %v2396 = vunpack.c.l.b16 %v2364
        %v2397 = vunpack.c.l.b16 %v2365
        %v2398 = vunpack.c.l.b16 %v2366
        %v2399 = vpack.c.b16 %v2384, %v2383
        %v2400 = vpack.c.b16 %v2386, %v2385
        %v2401 = vpack.c.b16 %v2388, %v2387
        %v2402 = vpack.c.b16 %v2390, %v2389
        %v2403 = vpack.c.b16 %v2392, %v2391
        %v2404 = vpack.c.b16 %v2394, %v2393
        %v2405 = vpack.c.b16 %v2396, %v2395
        %v2406 = vpack.c.b16 %v2398, %v2397
        %2415 = vmatpush.bf16.msra.mxu0 %v2406
        %2416 = vmatpush.bf16.msra.mxu0 %v2405
        %2417 = vmatpush.bf16.msra.mxu0 %v2404
        %2418 = vmatpush.bf16.msra.mxu0 %v2403
        %2419 = vmatpush.bf16.msra.mxu0 %v2402
        %2420 = vmatpush.bf16.msra.mxu0 %v2401
        %2421 = vmatpush.bf16.msra.mxu0 %v2400
        %2422 = vmatpush.bf16.msra.mxu0 %v2399
        %2423 = vmatmul.bf16.gmra.mxu0 %v2346
        %v2424 = vpop.f32.mrf.mxu0
        %v2425 = vadd.f32 0.0, %v2424
        %v2426 = vpop.f32.mrf.mxu0
        %v2427 = vadd.f32 0.0, %v2426
        %2428 = vmatmul.bf16.gmra.mxu0 %v2347
        %v2429 = vpop.f32.mrf.mxu0
        %v2430 = vadd.f32 0.0, %v2429
        %v2431 = vpop.f32.mrf.mxu0
        %v2432 = vadd.f32 0.0, %v2431
        %2433 = vmatmul.bf16.gmra.mxu0 %v2348
        %v2434 = vpop.f32.mrf.mxu0
        %v2435 = vadd.f32 0.0, %v2434
        %v2436 = vpop.f32.mrf.mxu0
        %v2437 = vadd.f32 0.0, %v2436
        %2438 = vmatmul.bf16.gmra.mxu0 %v2349
        %v2439 = vpop.f32.mrf.mxu0
        %v2440 = vadd.f32 0.0, %v2439
        %v2441 = vpop.f32.mrf.mxu0
        %v2442 = vadd.f32 0.0, %v2441
        %2443 = vdwg.mxu0
        %v2444 = vadd.f32 %v2330, %v2425
        %v2445 = vadd.f32 %v2331, %v2427
        %v2446 = vadd.f32 %v2332, %v2430
        %v2447 = vadd.f32 %v2333, %v2432
        %v2448 = vadd.f32 %v2334, %v2435
        %v2449 = vadd.f32 %v2335, %v2437
        %v2450 = vadd.f32 %v2336, %v2440
        %v2451 = vadd.f32 %v2337, %v2442
        %v2452 = vld [vmem:[%s776] sm:$0xf]
        %v2453 = vld [vmem:[%s776 + $0x8] sm:$0xf]
        %v2454 = vld [vmem:[%s776 + $0x10] sm:$0xf]
        %v2455 = vld [vmem:[%s776 + $0x18] sm:$0xf]
        %v2456 = vld [vmem:[%s776 + $0x20] sm:$0xf]
        %v2457 = vld [vmem:[%s776 + $0x28] sm:$0xf]
        %v2458 = vld [vmem:[%s776 + $0x30] sm:$0xf]
        %v2459 = vld [vmem:[%s776 + $0x38] sm:$0xf]
        %v2460 = vld [vmem:[%s5] sm:$0x3]
        %v2469 = vunpack.c.l.b16 %v2452
        %v2470 = vunpack.c.l.b16 %v2453
        %v2471 = vunpack.c.l.b16 %v2454
        %v2472 = vunpack.c.l.b16 %v2455
        %v2473 = vunpack.c.l.b16 %v2456
        %v2474 = vunpack.c.l.b16 %v2457
        %v2475 = vunpack.c.l.b16 %v2458
        %v2476 = vunpack.c.l.b16 %v2459
        %v2477 = vpack.c.b16 %v2470, %v2469
        %v2478 = vpack.c.b16 %v2472, %v2471
        %v2479 = vpack.c.b16 %v2474, %v2473
        %v2480 = vpack.c.b16 %v2476, %v2475
        %v2482 = vsel %vm386, %v2477, 0
        %v2485 = vsel %vm386, %v2478, 0
        %v2488 = vsel %vm386, %v2479, 0
        %v2491 = vsel %vm386, %v2480, 0
        %v2494 = vsel %vm399, %v2460, 0
        %2496 = vmatpush.bf16.msra.mxu0 0
        %2497 = vmatpush.bf16.msra.mxu0 0
        %2498 = vmatpush.bf16.msra.mxu0 0
        %2499 = vmatpush.bf16.msra.mxu0 0
        %2500 = vmatpush.bf16.msra.mxu0 0
        %2501 = vmatpush.bf16.msra.mxu0 0
        %2502 = vmatpush.bf16.msra.mxu0 0
        %2503 = vmatpush.bf16.msra.mxu0 %v2494
        %2504 = vmatmul.bf16.gmra.mxu0 %v2482
        %v2505 = vpop.f32.mrf.mxu0
        %v2506 = vadd.f32 0.0, %v2505
        %v2507 = vpop.f32.mrf.mxu0
        %v2508 = vadd.f32 0.0, %v2507
        %2509 = vmatmul.bf16.gmra.mxu0 %v2485
        %v2510 = vpop.f32.mrf.mxu0
        %v2511 = vadd.f32 0.0, %v2510
        %v2512 = vpop.f32.mrf.mxu0
        %v2513 = vadd.f32 0.0, %v2512
        %2514 = vmatmul.bf16.gmra.mxu0 %v2488
        %v2515 = vpop.f32.mrf.mxu0
        %v2516 = vadd.f32 0.0, %v2515
        %v2517 = vpop.f32.mrf.mxu0
        %v2518 = vadd.f32 0.0, %v2517
        %2519 = vmatmul.bf16.gmra.mxu0 %v2491
        %v2520 = vpop.f32.mrf.mxu0
        %v2521 = vadd.f32 0.0, %v2520
        %v2522 = vpop.f32.mrf.mxu0
        %v2523 = vadd.f32 0.0, %v2522
        %2524 = vdwg.mxu0
        %v2525 = vld [vmem:[%s4] sm:$0x1]
        %v2527 = vperm.slane %v2525, 0
        %v2529 = vadd.f32 %v2444, %v2527
        %v2530 = vadd.f32 %v2445, %v2527
        %v2531 = vadd.f32 %v2446, %v2527
        %v2532 = vadd.f32 %v2447, %v2527
        %v2533 = vadd.f32 %v2448, %v2527
        %v2534 = vadd.f32 %v2449, %v2527
        %v2535 = vadd.f32 %v2450, %v2527
        %v2536 = vadd.f32 %v2451, %v2527
        %v2537 = vadd.f32 %v2529, %v2506
        %v2538 = vadd.f32 %v2530, %v2508
        %v2539 = vadd.f32 %v2531, %v2511
        %v2540 = vadd.f32 %v2532, %v2513
        %v2541 = vadd.f32 %v2533, %v2516
        %v2542 = vadd.f32 %v2534, %v2518
        %v2543 = vadd.f32 %v2535, %v2521
        %v2544 = vadd.f32 %v2536, %v2523
        %v2545 = vld [vmem:[%s6] sm:$0x1]
        %v2547 = vperm.slane %v2545, 0
        %v2549 = vadd.f32 %v2537, %v2547
        %v2550 = vadd.f32 %v2538, %v2547
        %v2551 = vadd.f32 %v2539, %v2547
        %v2552 = vadd.f32 %v2540, %v2547
        %v2553 = vadd.f32 %v2541, %v2547
        %v2554 = vadd.f32 %v2542, %v2547
        %v2555 = vadd.f32 %v2543, %v2547
        %v2556 = vadd.f32 %v2544, %v2547
        %v2557 = vmax.f32 %v2549, 0.0
        %v2558 = vmax.f32 %v2550, 0.0
        %v2559 = vmax.f32 %v2551, 0.0
        %v2560 = vmax.f32 %v2552, 0.0
        %v2561 = vmax.f32 %v2553, 0.0
        %v2562 = vmax.f32 %v2554, 0.0
        %v2563 = vmax.f32 %v2555, 0.0
        %v2564 = vmax.f32 %v2556, 0.0
        %2565 = vst [vmem:[%s302] sm:$0xff] %v2557
        %2566 = vst [vmem:[%s302 + $0x8] sm:$0xff] %v2558
        %2567 = vst [vmem:[%s302 + $0x10] sm:$0xff] %v2559
        %2568 = vst [vmem:[%s302 + $0x18] sm:$0xff] %v2560
        %2569 = vst [vmem:[%s302 + $0x20] sm:$0xff] %v2561
        %2570 = vst [vmem:[%s302 + $0x28] sm:$0xff] %v2562
        %2571 = vst [vmem:[%s302 + $0x30] sm:$0xff] %v2563
        %2572 = vst [vmem:[%s302 + $0x38] sm:$0xff] %v2564
        %2573 = vst [vmem:[%s309] sm:$0xff] %v2549
        %2574 = vst [vmem:[%s309 + $0x8] sm:$0xff] %v2550
        %2575 = vst [vmem:[%s309 + $0x10] sm:$0xff] %v2551
        %2576 = vst [vmem:[%s309 + $0x18] sm:$0xff] %v2552
        %2577 = vst [vmem:[%s309 + $0x20] sm:$0xff] %v2553
        %2578 = vst [vmem:[%s309 + $0x28] sm:$0xff] %v2554
        %2579 = vst [vmem:[%s309 + $0x30] sm:$0xff] %v2555
        %2580 = vst [vmem:[%s309 + $0x38] sm:$0xff] %v2556
        %s2581 = sand.u32 %s186, 1
        %s2582 = scalar_lea.sflag [#allocation4], %s2581
        %s2583 = sand.u32 %s186, 1
        %s2584 = smul.addr %s2583, 64
        %s2585 = scalar_lea.vmem [#allocation3], %s2584
        %s2586 = sand.u32 %s212, 1
        %s2587 = scalar_lea.sflag [#allocation6], %s2586
        %s2588 = sand.u32 %s212, 1
        %s2589 = smul.addr %s2588, 64
        %s2590 = scalar_lea.vmem [#allocation5], %s2589
        // Predicated region
        $region49: #{tpu_custom_call.1} parent=47 // pred_check
          %p2591 = pneg %p196
        $region50: #{tpu_custom_call.1} parent=47 // pred_check_branch
          %2593 = sbr.rel (%p2591) target = $region52
        $region51: #{tpu_custom_call.1} parent=47 // pred_region
          %2595 = vsyncadd %s2582, 0
          %s2596 = smul.addr %s26, 8
          %s2597 = smul.addr %s2596, 8
          %s2598 = scalar_lea.hbm %s7, %s2597
          %s2599 = sshll.u32 %s2585, 4
          %s2600 = int_to_ptr.vmem [resolvable:$true] %s2599
          %s2601 = sshll.u32 %s2598, 4
          %s2602 = int_to_ptr.hbm [resolvable:$true] %s2601
          %2607 = dma.vmem_to_hbm [thread:$0]  %s2600, 1024, %s2602, %s2582, 128, 128, 8
        $region52: #{tpu_custom_call.1} parent=47 // pred_fallthru
          _
        // Predicated region
        $region53: #{tpu_custom_call.1} parent=47 // pred_check
          %p2608 = pneg %p222
        $region54: #{tpu_custom_call.1} parent=47 // pred_check_branch
          %2610 = sbr.rel (%p2608) target = $region56
        $region55: #{tpu_custom_call.1} parent=47 // pred_region
          %2612 = vsyncadd %s2587, 0
          %s2613 = smul.addr %s26, 8
          %s2614 = smul.addr %s2613, 8
          %s2615 = scalar_lea.hbm %s8, %s2614
          %s2616 = sshll.u32 %s2590, 4
          %s2617 = int_to_ptr.vmem [resolvable:$true] %s2616
          %s2618 = sshll.u32 %s2615, 4
          %s2619 = int_to_ptr.hbm [resolvable:$true] %s2618
          %2624 = dma.vmem_to_hbm [thread:$0]  %s2617, 1024, %s2619, %s2587, 128, 128, 8
        $region56: #{tpu_custom_call.1} parent=47 // pred_fallthru
          _
      $region48: #{tpu_custom_call.1} parent=5 // pred_fallthru
        _
      %p2625 = scmp.le.s32.totalorder 2, %s21
      // Predicated region
      $region57: #{tpu_custom_call.1} parent=5 // pred_check
        %p2626 = pneg %p2625
      $region58: #{tpu_custom_call.1} parent=5 // pred_check_branch
        %2628 = sbr.rel (%p2626) target = $region60
      $region59: #{tpu_custom_call.1} parent=5 // pred_region
        %s2629 = ssub.s32 %s21, 2
        // Predicated region
        $region61: #{tpu_custom_call.1} parent=59 // pred_check
          %p2630 = pneg %p202
        $region62: #{tpu_custom_call.1} parent=59 // pred_check_branch
          %2632 = sbr.rel (%p2630) target = $region64
        $region63: #{tpu_custom_call.1} parent=59 // pred_region
          %s2633 = sand.u32 %s187, 1
          %s2634 = scalar_lea.sflag [#allocation4], %s2633
          %s2635 = sand.u32 %s187, 1
          %s2636 = smul.addr %s2635, 64
          %s2637 = scalar_lea.vmem [#allocation3], %s2636
          %2639 = dma.done %s2634, 1024
        $region64: #{tpu_custom_call.1} parent=59 // pred_fallthru
          _
        // Predicated region
        $region65: #{tpu_custom_call.1} parent=59 // pred_check
          %p2640 = pneg %p228
        $region66: #{tpu_custom_call.1} parent=59 // pred_check_branch
          %2642 = sbr.rel (%p2640) target = $region68
        $region67: #{tpu_custom_call.1} parent=59 // pred_region
          %s2643 = sand.u32 %s213, 1
          %s2644 = scalar_lea.sflag [#allocation6], %s2643
          %s2645 = sand.u32 %s213, 1
          %s2646 = smul.addr %s2645, 64
          %s2647 = scalar_lea.vmem [#allocation5], %s2646
          %2649 = dma.done %s2644, 1024
        $region68: #{tpu_custom_call.1} parent=59 // pred_fallthru
          _
      $region60: #{tpu_custom_call.1} parent=5 // pred_fallthru
        _
    $region6: #{tpu_custom_call.1} parent=1 // loop_footer
      %s25 = sadd.s32 1, %s21
    $region7: #{tpu_custom_call.1} parent=1 // loop_footer_branch
      %20 = sbr.rel target = $region3
    $region8: #{tpu_custom_call.1} parent=1 // loop_exit
      _
    %2650 = vsyncpa [#allocation4], 1
    %s2651 = scalar_lea.sflag [#allocation4], 1
    %2652 = vsyncpa %s2651, 1
    %2653 = vsyncpa [#allocation6], 1
    %s2654 = scalar_lea.sflag [#allocation6], 1
    %2655 = vsyncpa %s2654, 1

</llo_original>
